<compile_context>
chip_gen: v5e
topology: v5e:2x2
jax: 0.10.0
libtpu: 0.0.40
codegen_flags: <defaults>
</compile_context>

<pallas_src>
import numpy as np
import jax
import jax.numpy as jnp
from jax.experimental import pallas as pl
from jax.experimental.pallas import tpu as pltpu


def _tree_lstm_kernel(order_ref,   # SMEM (B*N,) int32 — post-order node schedule
                      parent_ref,  # SMEM (B*N,) int32 — parent of scheduled node (root -> self)
                      x_ref,       # (N, D)  sentence embeddings (batch dim squeezed)
                      w_iou_ref,   # (D, 3H) fused [W_i | W_o | W_u]
                      b_iou_ref,   # (1, 3H)
                      w_f_ref,     # (D, H)
                      b_f_ref,     # (1, H)
                      u_iou_ref,   # (H, 3H) fused [U_i | U_o | U_u]
                      u_f_ref,     # (H, H)
                      ctx_ref,     # out (N, H) per-node hidden states (working h buffer)
                      xp_iou_scr,  # VMEM (N, 3H) input projections (i/o/u gates, bias folded)
                      xp_f_scr,    # VMEM (N, H)  input projection (forget gate, bias folded)
                      htil_scr,    # VMEM (N, H)  running child-sum of h per (future-parent) node
                      fc_scr):     # VMEM (N, H)  running sum_k f_k * c_k per node
    N, H = ctx_ref.shape
    base = pl.program_id(0) * N

    # Fused, lane-dense input projections (+bias) for the whole sentence, once.
    xp_iou_scr[...] = (jnp.dot(x_ref[...], w_iou_ref[...],
                               preferred_element_type=jnp.float32) + b_iou_ref[...])
    xp_f_scr[...] = (jnp.dot(x_ref[...], w_f_ref[...],
                             preferred_element_type=jnp.float32) + b_f_ref[...])

    # Accumulator scratch persists across grid iterations: re-zero per sentence.
    htil_scr[...] = jnp.zeros_like(htil_scr)
    fc_scr[...] = jnp.zeros_like(fc_scr)

    # Loop-invariant recurrent weights: hoisted out of the serial recurrence.
    u_iou = u_iou_ref[...]
    u_f = u_f_ref[...]

    def step_fn(step, carry):
        j = order_ref[base + step]     # node processed at this step
        p = parent_ref[base + step]    # its parent (self for the root)

        h_tilde = htil_scr[pl.ds(j, 1), :]              # (1, H) child-sum of h
        fc = fc_scr[pl.ds(j, 1), :]                     # (1, H) sum_k f_jk * c_k

        # Fused i/o/u gates: one (1,H)@(H,3H) recurrent matmul.
        iou = xp_iou_scr[pl.ds(j, 1), :] + jnp.dot(
            h_tilde, u_iou, preferred_element_type=jnp.float32)   # (1, 3H)
        i_g = jax.nn.sigmoid(iou[:, :H])
        o_g = jax.nn.sigmoid(iou[:, H:2 * H])
        u_g = jnp.tanh(iou[:, 2 * H:])

        c_new = i_g * u_g + fc                           # (1, H)
        h_new = o_g * jnp.tanh(c_new)                    # (1, H)

        # Output block doubles as the hidden-state buffer (no h_scr copy).
        ctx_ref[pl.ds(j, 1), :] = h_new

        # Forget gate uses the *parent's* input projection; push this node's
        # contribution into the parent's accumulator rows.  Post-order means
        # the parent has not been processed yet; the root (last step) pushes
        # harmlessly onto itself.
        f_g = jax.nn.sigmoid(xp_f_scr[pl.ds(p, 1), :] + jnp.dot(
            h_new, u_f, preferred_element_type=jnp.float32))      # (1, H)
        htil_scr[pl.ds(p, 1), :] = htil_scr[pl.ds(p, 1), :] + h_new
        fc_scr[pl.ds(p, 1), :] = fc_scr[pl.ds(p, 1), :] + f_g * c_new
        return carry

    # Dynamic scratch indexing serializes iterations anyway; full unroll only
    # for short sentences (code size / vreg pressure at large N).
    jax.lax.fori_loop(0, N, step_fn, 0, unroll=True if N <= 32 else 8)


def build_tree_tensors(parents_list, n):
    """Host-side equivalent of read_tree(): post-order schedule plus the parent
    of each scheduled node, from 1-based parent indices (0 = root).  All n
    tokens belong to the tree."""
    B = len(parents_list)
    order = np.zeros((B, n), np.int32)
    parent_sched = np.zeros((B, n), np.int32)
    for b, parents in enumerate(parents_list):
        children = [[] for _ in range(n)]
        root = None
        for i, p in enumerate(parents):
            if p == 0:
                root = i
            else:
                children[p - 1].append(i)
        visited = []

        def visit(node):
            for c in children[node]:
                visit(c)
            visited.append(node)

        visit(root)
        order[b] = np.array(visited, np.int32)
        # 0-based parent per token; the root points at itself (its final
        # accumulator push is never read again).
        par0 = np.array([(parents[i] - 1) if parents[i] != 0 else i
                         for i in range(n)], np.int32)
        parent_sched[b] = par0[order[b]]
    return order, parent_sched


def init_params(key, d, h):
    ks = jax.random.split(key, 6)
    s = 0.1
    return {
        "w_iou": s * jax.random.normal(ks[0], (3, d, h), jnp.float32),
        "u_iou": s * jax.random.normal(ks[1], (3, h, h), jnp.float32),
        "b_iou": s * jax.random.normal(ks[2], (3, 1, h), jnp.float32),
        "w_f":   s * jax.random.normal(ks[3], (d, h), jnp.float32),
        "u_f":   s * jax.random.normal(ks[4], (h, h), jnp.float32),
        "b_f":   s * jax.random.normal(ks[5], (1, h), jnp.float32),
    }


def tree_lstm_forward(params, parents_list, inputs):
    """inputs: (N, B, D) float32; parents_list: B lists of 1-based parents (0=root).
    Returns (contexts (N, B, H), hs (1, B, H)) like TreeLSTM.forward (unidirectional)."""
    N, B, D = inputs.shape
    H = params["u_f"].shape[0]

    order_np, parent_np = build_tree_tensors(parents_list, N)
    x = jnp.transpose(inputs, (1, 0, 2))                     # (B, N, D)
    order = jnp.asarray(order_np.reshape(-1))                # (B*N,) flat SMEM schedule
    parent = jnp.asarray(parent_np.reshape(-1))              # (B*N,)

    # Fuse gate weights host-side into lane-dense per-gate-group matrices.
    w_iou = jnp.concatenate([params["w_iou"][0], params["w_iou"][1],
                             params["w_iou"][2]], axis=1)    # (D, 3H)
    b_iou = jnp.concatenate([params["b_iou"][0], params["b_iou"][1],
                             params["b_iou"][2]], axis=1)    # (1, 3H)
    u_iou = jnp.concatenate([params["u_iou"][0], params["u_iou"][1],
                             params["u_iou"][2]], axis=1)    # (H, 3H)

    grid_spec = pltpu.PrefetchScalarGridSpec(
        num_scalar_prefetch=2,
        grid=(B,),
        in_specs=[
            pl.BlockSpec((None, N, D), lambda b, o, p: (b, 0, 0)),
            pl.BlockSpec((D, 3 * H), lambda b, o, p: (0, 0)),
            pl.BlockSpec((1, 3 * H), lambda b, o, p: (0, 0)),
            pl.BlockSpec((D, H), lambda b, o, p: (0, 0)),
            pl.BlockSpec((1, H), lambda b, o, p: (0, 0)),
            pl.BlockSpec((H, 3 * H), lambda b, o, p: (0, 0)),
            pl.BlockSpec((H, H), lambda b, o, p: (0, 0)),
        ],
        out_specs=pl.BlockSpec((None, N, H), lambda b, o, p: (b, 0, 0)),
        scratch_shapes=[pltpu.VMEM((N, 3 * H), jnp.float32),
                        pltpu.VMEM((N, H), jnp.float32),
                        pltpu.VMEM((N, H), jnp.float32),
                        pltpu.VMEM((N, H), jnp.float32)],
    )

    ctx = pl.pallas_call(
        _tree_lstm_kernel,
        out_shape=jax.ShapeDtypeStruct((B, N, H), jnp.float32),
        grid_spec=grid_spec,
        compiler_params=pltpu.CompilerParams(dimension_semantics=("parallel",)),
    )(order, parent, x, w_iou, b_iou, params["w_f"], params["b_f"],
      u_iou, params["u_f"])

    contexts_tensor = jnp.transpose(ctx, (1, 0, 2))           # (N, B, H)
    # state[1]: root hidden state = node processed last; index known host-side.
    root_idx = jnp.asarray(order_np[:, -1], jnp.int32)        # (B,)
    hs_tensor = ctx[jnp.arange(B), root_idx, :][None, :, :]   # (1, B, H)
    return contexts_tensor, hs_tensor


def _reference_forward(params, parents_list, inputs):
    """Pure NumPy ChildSum-TreeLSTM (per-node, per-child loops) for validation."""
    N, B, D = inputs.shape
    H = np.asarray(params["u_f"]).shape[0]
    w_iou = np.asarray(params["w_iou"]); u_iou = np.asarray(params["u_iou"])
    b_iou = np.asarray(params["b_iou"]); w_f = np.asarray(params["w_f"])
    u_f = np.asarray(params["u_f"]); b_f = np.asarray(params["b_f"])
    x = np.asarray(inputs)

    def sig(v):
        return 1.0 / (1.0 + np.exp(-v))

    ctx = np.zeros((N, B, H), np.float32)
    hs = np.zeros((1, B, H), np.float32)
    for b, parents in enumerate(parents_list):
        children = [[] for _ in range(N)]
        root = None
        for i, p in enumerate(parents):
            if p == 0:
                root = i
            else:
                children[p - 1].append(i)
        h = np.zeros((N, H), np.float32)
        c = np.zeros((N, H), np.float32)

        def visit(j):
            for k in children[j]:
                visit(k)
            xj = x[j, b]
            h_tilde = np.zeros(H, np.float32)
            for k in children[j]:
                h_tilde = h_tilde + h[k]
            i_g = sig(xj @ w_iou[0] + h_tilde @ u_iou[0] + b_iou[0][0])
            o_g = sig(xj @ w_iou[1] + h_tilde @ u_iou[1] + b_iou[1][0])
            u_g = np.tanh(xj @ w_iou[2] + h_tilde @ u_iou[2] + b_iou[2][0])
            fc = np.zeros(H, np.float32)
            for k in children[j]:
                f = sig(xj @ w_f + h[k] @ u_f + b_f[0])
                fc = fc + f * c[k]
            c[j] = i_g * u_g + fc
            h[j] = o_g * np.tanh(c[j])

        visit(root)
        ctx[:, b, :] = h
        hs[0, b, :] = h[root]
    return ctx, hs


if __name__ == "__main__":
    N, B, D, H = 8, 2, 32, 32   # seq_len, batch (sentences), embedding, hidden

    key = jax.random.PRNGKey(0)
    k_par, k_x = jax.random.split(key)
    params = init_params(k_par, D, H)

    # Deterministic example "trees" (what read_tree would parse from strings):
    # 1-based parent index per token, 0 marks the root.
    parents_list = [
        [2, 3, 4, 5, 6, 7, 8, 0],     # right-branching chain, token 8 is root
        [3, 3, 8, 3, 8, 8, 8, 0],     # branchy tree rooted at token 8
    ]

    inputs = jax.random.normal(k_x, (N, B, D), jnp.float32)   # (seq, batch, emb)

    contexts_tensor, hs_tensor = tree_lstm_forward(params, parents_list, inputs)
    jax.block_until_ready((contexts_tensor, hs_tensor))

    assert contexts_tensor.shape == (N, B, H)
    assert hs_tensor.shape == (1, B, H)

    # Validate the accumulator restructure against a straightforward reference.
    ref_ctx, ref_hs = _reference_forward(params, parents_list, inputs)
    ctx_err = float(np.max(np.abs(np.asarray(contexts_tensor) - ref_ctx)))
    hs_err = float(np.max(np.abs(np.asarray(hs_tensor) - ref_hs)))
    assert ctx_err < 5e-3 and hs_err < 5e-3, (ctx_err, hs_err)

    print("KERNEL_OK")
</pallas_src>

<mosaic_0001>
module attributes {stable_mosaic.version = 11 : i64} {
  func.func @_tree_lstm_kernel(%arg0: i32, %arg1: memref<16xi32, #tpu.memory_space<smem>>, %arg2: memref<16xi32, #tpu.memory_space<smem>>, %arg3: memref<1x8x32xf32, #tpu.memory_space<vmem>>, %arg4: memref<32x96xf32, #tpu.memory_space<vmem>>, %arg5: memref<1x96xf32, #tpu.memory_space<vmem>>, %arg6: memref<32x32xf32, #tpu.memory_space<vmem>>, %arg7: memref<1x32xf32, #tpu.memory_space<vmem>>, %arg8: memref<32x96xf32, #tpu.memory_space<vmem>>, %arg9: memref<32x32xf32, #tpu.memory_space<vmem>>, %arg10: memref<1x8x32xf32, #tpu.memory_space<vmem>>, %arg11: memref<8x96xf32, #tpu.memory_space<vmem>>, %arg12: memref<8x32xf32, #tpu.memory_space<vmem>>, %arg13: memref<8x32xf32, #tpu.memory_space<vmem>>, %arg14: memref<8x32xf32, #tpu.memory_space<vmem>>) attributes {dimension_semantics = [#tpu.dimension_semantics<parallel>], iteration_bounds = array<i64: 2>, scalar_prefetch = 2 : i64, scratch_operands = 4 : i64, tpu.core_type = #tpu.core_type<tc>, window_params = [{transform_indices = @transform_0, window_bounds = array<i64: 1, 8, 32>}, {pipeline_mode = #tpu.pipeline_mode<synchronous>, transform_indices = @transform_1, window_bounds = array<i64: 32, 96>}, {pipeline_mode = #tpu.pipeline_mode<synchronous>, transform_indices = @transform_2, window_bounds = array<i64: 1, 96>}, {pipeline_mode = #tpu.pipeline_mode<synchronous>, transform_indices = @transform_3, window_bounds = array<i64: 32, 32>}, {pipeline_mode = #tpu.pipeline_mode<synchronous>, transform_indices = @transform_4, window_bounds = array<i64: 1, 32>}, {pipeline_mode = #tpu.pipeline_mode<synchronous>, transform_indices = @transform_5, window_bounds = array<i64: 32, 96>}, {pipeline_mode = #tpu.pipeline_mode<synchronous>, transform_indices = @transform_6, window_bounds = array<i64: 32, 32>}, {transform_indices = @transform_7, window_bounds = array<i64: 1, 8, 32>}]} {
    %c8_i32 = arith.constant 8 : i32
    %0 = arith.muli %arg0, %c8_i32 : i32
    %c0 = arith.constant 0 : index
    %c0_0 = arith.constant 0 : index
    %c0_1 = arith.constant 0 : index
    %1 = vector.load %arg3[%c0, %c0_0, %c0_1] : memref<1x8x32xf32, #tpu.memory_space<vmem>>, vector<1x8x32xf32>
    %2 = vector.shape_cast %1 : vector<1x8x32xf32> to vector<8x32xf32>
    %c0_2 = arith.constant 0 : index
    %c0_3 = arith.constant 0 : index
    %3 = vector.load %arg4[%c0_2, %c0_3] : memref<32x96xf32, #tpu.memory_space<vmem>>, vector<32x96xf32>
    %cst = arith.constant dense<0.000000e+00> : vector<8x96xf32>
    %4 = tpu.matmul %2, %3, %cst {dimension_numbers = #tpu.dot_dimension_numbers<[1], [0], [0], [1], [0, 0, 1, 1], [], []>} : vector<8x32xf32>, vector<32x96xf32>, vector<8x96xf32> -> vector<8x96xf32>
    %c0_4 = arith.constant 0 : index
    %c0_5 = arith.constant 0 : index
    %5 = vector.load %arg5[%c0_4, %c0_5] : memref<1x96xf32, #tpu.memory_space<vmem>>, vector<1x96xf32>
    %6 = vector.broadcast %5 : vector<1x96xf32> to vector<8x96xf32>
    %7 = arith.addf %4, %6 : vector<8x96xf32>
    %c0_6 = arith.constant 0 : index
    %c0_7 = arith.constant 0 : index
    %8 = vector.load %arg11[%c0_6, %c0_7] : memref<8x96xf32, #tpu.memory_space<vmem>>, vector<8x96xf32>
    tpu.vector_store %arg11[%c0_6, %c0_7], %7 {strides = array<i32>} : memref<8x96xf32, #tpu.memory_space<vmem>>, vector<8x96xf32>,
    %c0_8 = arith.constant 0 : index
    %c0_9 = arith.constant 0 : index
    %c0_10 = arith.constant 0 : index
    %9 = vector.load %arg3[%c0_8, %c0_9, %c0_10] : memref<1x8x32xf32, #tpu.memory_space<vmem>>, vector<1x8x32xf32>
    %10 = vector.shape_cast %9 : vector<1x8x32xf32> to vector<8x32xf32>
    %c0_11 = arith.constant 0 : index
    %c0_12 = arith.constant 0 : index
    %11 = vector.load %arg6[%c0_11, %c0_12] : memref<32x32xf32, #tpu.memory_space<vmem>>, vector<32x32xf32>
    %cst_13 = arith.constant dense<0.000000e+00> : vector<8x32xf32>
    %12 = tpu.matmul %10, %11, %cst_13 {dimension_numbers = #tpu.dot_dimension_numbers<[1], [0], [0], [1], [0, 0, 1, 1], [], []>} : vector<8x32xf32>, vector<32x32xf32>, vector<8x32xf32> -> vector<8x32xf32>
    %c0_14 = arith.constant 0 : index
    %c0_15 = arith.constant 0 : index
    %13 = vector.load %arg7[%c0_14, %c0_15] : memref<1x32xf32, #tpu.memory_space<vmem>>, vector<1x32xf32>
    %14 = vector.broadcast %13 : vector<1x32xf32> to vector<8x32xf32>
    %15 = arith.addf %12, %14 : vector<8x32xf32>
    %c0_16 = arith.constant 0 : index
    %c0_17 = arith.constant 0 : index
    %16 = vector.load %arg12[%c0_16, %c0_17] : memref<8x32xf32, #tpu.memory_space<vmem>>, vector<8x32xf32>
    tpu.vector_store %arg12[%c0_16, %c0_17], %15 {strides = array<i32>} : memref<8x32xf32, #tpu.memory_space<vmem>>, vector<8x32xf32>,
    %cst_18 = arith.constant 0.000000e+00 : f32
    %17 = vector.broadcast %cst_18 : f32 to vector<8x32xf32>
    %c0_19 = arith.constant 0 : index
    %c0_20 = arith.constant 0 : index
    %18 = vector.load %arg13[%c0_19, %c0_20] : memref<8x32xf32, #tpu.memory_space<vmem>>, vector<8x32xf32>
    tpu.vector_store %arg13[%c0_19, %c0_20], %17 {strides = array<i32>} : memref<8x32xf32, #tpu.memory_space<vmem>>, vector<8x32xf32>,
    %cst_21 = arith.constant 0.000000e+00 : f32
    %19 = vector.broadcast %cst_21 : f32 to vector<8x32xf32>
    %c0_22 = arith.constant 0 : index
    %c0_23 = arith.constant 0 : index
    %20 = vector.load %arg14[%c0_22, %c0_23] : memref<8x32xf32, #tpu.memory_space<vmem>>, vector<8x32xf32>
    tpu.vector_store %arg14[%c0_22, %c0_23], %19 {strides = array<i32>} : memref<8x32xf32, #tpu.memory_space<vmem>>, vector<8x32xf32>,
    %c0_24 = arith.constant 0 : index
    %c0_25 = arith.constant 0 : index
    %21 = vector.load %arg8[%c0_24, %c0_25] : memref<32x96xf32, #tpu.memory_space<vmem>>, vector<32x96xf32>
    %c0_26 = arith.constant 0 : index
    %c0_27 = arith.constant 0 : index
    %22 = vector.load %arg9[%c0_26, %c0_27] : memref<32x32xf32, #tpu.memory_space<vmem>>, vector<32x32xf32>
    %c0_i32 = arith.constant 0 : i32
    %23 = arith.addi %0, %c0_i32 : i32
    %24 = arith.index_cast %23 : i32 to index
    %25 = memref.load %arg1[%24] : memref<16xi32, #tpu.memory_space<smem>>
    %26 = arith.addi %0, %c0_i32 : i32
    %27 = arith.index_cast %26 : i32 to index
    %28 = memref.load %arg2[%27] : memref<16xi32, #tpu.memory_space<smem>>
    %29 = arith.index_cast %25 : i32 to index
    %c0_28 = arith.constant 0 : index
    %30 = vector.load %arg13[%29, %c0_28] : memref<8x32xf32, #tpu.memory_space<vmem>>, vector<1x32xf32>
    %31 = arith.index_cast %25 : i32 to index
    %c0_29 = arith.constant 0 : index
    %32 = vector.load %arg14[%31, %c0_29] : memref<8x32xf32, #tpu.memory_space<vmem>>, vector<1x32xf32>
    %33 = arith.index_cast %25 : i32 to index
    %c0_30 = arith.constant 0 : index
    %34 = vector.load %arg11[%33, %c0_30] : memref<8x96xf32, #tpu.memory_space<vmem>>, vector<1x96xf32>
    %cst_31 = arith.constant dense<0.000000e+00> : vector<1x96xf32>
    %35 = tpu.matmul %30, %21, %cst_31 {dimension_numbers = #tpu.dot_dimension_numbers<[1], [0], [0], [1], [0, 0, 1, 1], [], []>} : vector<1x32xf32>, vector<32x96xf32>, vector<1x96xf32> -> vector<1x96xf32>
    %36 = arith.addf %34, %35 : vector<1x96xf32>
    %37 = vector.extract_strided_slice %36 {offsets = [0, 0], sizes = [1, 32], strides = [1, 1]} : vector<1x96xf32> to vector<1x32xf32>
    %38 = arith.negf %37 : vector<1x32xf32>
    %39 = math.exp %38 : vector<1x32xf32>
    %cst_32 = arith.constant 1.000000e+00 : f32
    %40 = vector.broadcast %cst_32 : f32 to vector<1x32xf32>
    %41 = arith.addf %40, %39 : vector<1x32xf32>
    %42 = arith.divf %40, %41 : vector<1x32xf32>
    %43 = vector.extract_strided_slice %36 {offsets = [0, 32], sizes = [1, 32], strides = [1, 1]} : vector<1x96xf32> to vector<1x32xf32>
    %44 = arith.negf %43 : vector<1x32xf32>
    %45 = math.exp %44 : vector<1x32xf32>
    %cst_33 = arith.constant 1.000000e+00 : f32
    %46 = vector.broadcast %cst_33 : f32 to vector<1x32xf32>
    %47 = arith.addf %46, %45 : vector<1x32xf32>
    %48 = arith.divf %46, %47 : vector<1x32xf32>
    %49 = vector.extract_strided_slice %36 {offsets = [0, 64], sizes = [1, 32], strides = [1, 1]} : vector<1x96xf32> to vector<1x32xf32>
    %50 = math.tanh %49 : vector<1x32xf32>
    %51 = arith.mulf %42, %50 : vector<1x32xf32>
    %52 = arith.addf %51, %32 : vector<1x32xf32>
    %53 = math.tanh %52 : vector<1x32xf32>
    %54 = arith.mulf %48, %53 : vector<1x32xf32>
    %c0_34 = arith.constant 0 : index
    %55 = arith.index_cast %25 : i32 to index
    %c0_35 = arith.constant 0 : index
    %56 = vector.load %arg10[%c0_34, %55, %c0_35] : memref<1x8x32xf32, #tpu.memory_space<vmem>>, vector<1x1x32xf32>
    %57 = vector.shape_cast %56 : vector<1x1x32xf32> to vector<1x32xf32>
    %58 = vector.shape_cast %54 : vector<1x32xf32> to vector<1x1x32xf32>
    tpu.vector_store %arg10[%c0_34, %55, %c0_35], %58 {strides = array<i32>} : memref<1x8x32xf32, #tpu.memory_space<vmem>>, vector<1x1x32xf32>,
    %59 = arith.index_cast %28 : i32 to index
    %c0_36 = arith.constant 0 : index
    %60 = vector.load %arg12[%59, %c0_36] : memref<8x32xf32, #tpu.memory_space<vmem>>, vector<1x32xf32>
    %cst_37 = arith.constant dense<0.000000e+00> : vector<1x32xf32>
    %61 = tpu.matmul %54, %22, %cst_37 {dimension_numbers = #tpu.dot_dimension_numbers<[1], [0], [0], [1], [0, 0, 1, 1], [], []>} : vector<1x32xf32>, vector<32x32xf32>, vector<1x32xf32> -> vector<1x32xf32>
    %62 = arith.addf %60, %61 : vector<1x32xf32>
    %63 = arith.negf %62 : vector<1x32xf32>
    %64 = math.exp %63 : vector<1x32xf32>
    %cst_38 = arith.constant 1.000000e+00 : f32
    %65 = vector.broadcast %cst_38 : f32 to vector<1x32xf32>
    %66 = arith.addf %65, %64 : vector<1x32xf32>
    %67 = arith.divf %65, %66 : vector<1x32xf32>
    %68 = arith.index_cast %28 : i32 to index
    %c0_39 = arith.constant 0 : index
    %69 = vector.load %arg13[%68, %c0_39] : memref<8x32xf32, #tpu.memory_space<vmem>>, vector<1x32xf32>
    %70 = arith.addf %69, %54 : vector<1x32xf32>
    %71 = arith.index_cast %28 : i32 to index
    %c0_40 = arith.constant 0 : index
    %72 = vector.load %arg13[%71, %c0_40] : memref<8x32xf32, #tpu.memory_space<vmem>>, vector<1x32xf32>
    tpu.vector_store %arg13[%71, %c0_40], %70 {strides = array<i32>} : memref<8x32xf32, #tpu.memory_space<vmem>>, vector<1x32xf32>,
    %73 = arith.index_cast %28 : i32 to index
    %c0_41 = arith.constant 0 : index
    %74 = vector.load %arg14[%73, %c0_41] : memref<8x32xf32, #tpu.memory_space<vmem>>, vector<1x32xf32>
    %75 = arith.mulf %67, %52 : vector<1x32xf32>
    %76 = arith.addf %74, %75 : vector<1x32xf32>
    %77 = arith.index_cast %28 : i32 to index
    %c0_42 = arith.constant 0 : index
    %78 = vector.load %arg14[%77, %c0_42] : memref<8x32xf32, #tpu.memory_space<vmem>>, vector<1x32xf32>
    tpu.vector_store %arg14[%77, %c0_42], %76 {strides = array<i32>} : memref<8x32xf32, #tpu.memory_space<vmem>>, vector<1x32xf32>,
    %c1_i32 = arith.constant 1 : i32
    %79 = arith.addi %0, %c1_i32 : i32
    %80 = arith.index_cast %79 : i32 to index
    %81 = memref.load %arg1[%80] : memref<16xi32, #tpu.memory_space<smem>>
    %82 = arith.addi %0, %c1_i32 : i32
    %83 = arith.index_cast %82 : i32 to index
    %84 = memref.load %arg2[%83] : memref<16xi32, #tpu.memory_space<smem>>
    %85 = arith.index_cast %81 : i32 to index
    %c0_43 = arith.constant 0 : index
    %86 = vector.load %arg13[%85, %c0_43] : memref<8x32xf32, #tpu.memory_space<vmem>>, vector<1x32xf32>
    %87 = arith.index_cast %81 : i32 to index
    %c0_44 = arith.constant 0 : index
    %88 = vector.load %arg14[%87, %c0_44] : memref<8x32xf32, #tpu.memory_space<vmem>>, vector<1x32xf32>
    %89 = arith.index_cast %81 : i32 to index
    %c0_45 = arith.constant 0 : index
    %90 = vector.load %arg11[%89, %c0_45] : memref<8x96xf32, #tpu.memory_space<vmem>>, vector<1x96xf32>
    %cst_46 = arith.constant dense<0.000000e+00> : vector<1x96xf32>
    %91 = tpu.matmul %86, %21, %cst_46 {dimension_numbers = #tpu.dot_dimension_numbers<[1], [0], [0], [1], [0, 0, 1, 1], [], []>} : vector<1x32xf32>, vector<32x96xf32>, vector<1x96xf32> -> vector<1x96xf32>
    %92 = arith.addf %90, %91 : vector<1x96xf32>
    %93 = vector.extract_strided_slice %92 {offsets = [0, 0], sizes = [1, 32], strides = [1, 1]} : vector<1x96xf32> to vector<1x32xf32>
    %94 = arith.negf %93 : vector<1x32xf32>
    %95 = math.exp %94 : vector<1x32xf32>
    %cst_47 = arith.constant 1.000000e+00 : f32
    %96 = vector.broadcast %cst_47 : f32 to vector<1x32xf32>
    %97 = arith.addf %96, %95 : vector<1x32xf32>
    %98 = arith.divf %96, %97 : vector<1x32xf32>
    %99 = vector.extract_strided_slice %92 {offsets = [0, 32], sizes = [1, 32], strides = [1, 1]} : vector<1x96xf32> to vector<1x32xf32>
    %100 = arith.negf %99 : vector<1x32xf32>
    %101 = math.exp %100 : vector<1x32xf32>
    %cst_48 = arith.constant 1.000000e+00 : f32
    %102 = vector.broadcast %cst_48 : f32 to vector<1x32xf32>
    %103 = arith.addf %102, %101 : vector<1x32xf32>
    %104 = arith.divf %102, %103 : vector<1x32xf32>
    %105 = vector.extract_strided_slice %92 {offsets = [0, 64], sizes = [1, 32], strides = [1, 1]} : vector<1x96xf32> to vector<1x32xf32>
    %106 = math.tanh %105 : vector<1x32xf32>
    %107 = arith.mulf %98, %106 : vector<1x32xf32>
    %108 = arith.addf %107, %88 : vector<1x32xf32>
    %109 = math.tanh %108 : vector<1x32xf32>
    %110 = arith.mulf %104, %109 : vector<1x32xf32>
    %c0_49 = arith.constant 0 : index
    %111 = arith.index_cast %81 : i32 to index
    %c0_50 = arith.constant 0 : index
    %112 = vector.load %arg10[%c0_49, %111, %c0_50] : memref<1x8x32xf32, #tpu.memory_space<vmem>>, vector<1x1x32xf32>
    %113 = vector.shape_cast %112 : vector<1x1x32xf32> to vector<1x32xf32>
    %114 = vector.shape_cast %110 : vector<1x32xf32> to vector<1x1x32xf32>
    tpu.vector_store %arg10[%c0_49, %111, %c0_50], %114 {strides = array<i32>} : memref<1x8x32xf32, #tpu.memory_space<vmem>>, vector<1x1x32xf32>,
    %115 = arith.index_cast %84 : i32 to index
    %c0_51 = arith.constant 0 : index
    %116 = vector.load %arg12[%115, %c0_51] : memref<8x32xf32, #tpu.memory_space<vmem>>, vector<1x32xf32>
    %cst_52 = arith.constant dense<0.000000e+00> : vector<1x32xf32>
    %117 = tpu.matmul %110, %22, %cst_52 {dimension_numbers = #tpu.dot_dimension_numbers<[1], [0], [0], [1], [0, 0, 1, 1], [], []>} : vector<1x32xf32>, vector<32x32xf32>, vector<1x32xf32> -> vector<1x32xf32>
    %118 = arith.addf %116, %117 : vector<1x32xf32>
    %119 = arith.negf %118 : vector<1x32xf32>
    %120 = math.exp %119 : vector<1x32xf32>
    %cst_53 = arith.constant 1.000000e+00 : f32
    %121 = vector.broadcast %cst_53 : f32 to vector<1x32xf32>
    %122 = arith.addf %121, %120 : vector<1x32xf32>
    %123 = arith.divf %121, %122 : vector<1x32xf32>
    %124 = arith.index_cast %84 : i32 to index
    %c0_54 = arith.constant 0 : index
    %125 = vector.load %arg13[%124, %c0_54] : memref<8x32xf32, #tpu.memory_space<vmem>>, vector<1x32xf32>
    %126 = arith.addf %125, %110 : vector<1x32xf32>
    %127 = arith.index_cast %84 : i32 to index
    %c0_55 = arith.constant 0 : index
    %128 = vector.load %arg13[%127, %c0_55] : memref<8x32xf32, #tpu.memory_space<vmem>>, vector<1x32xf32>
    tpu.vector_store %arg13[%127, %c0_55], %126 {strides = array<i32>} : memref<8x32xf32, #tpu.memory_space<vmem>>, vector<1x32xf32>,
    %129 = arith.index_cast %84 : i32 to index
    %c0_56 = arith.constant 0 : index
    %130 = vector.load %arg14[%129, %c0_56] : memref<8x32xf32, #tpu.memory_space<vmem>>, vector<1x32xf32>
    %131 = arith.mulf %123, %108 : vector<1x32xf32>
    %132 = arith.addf %130, %131 : vector<1x32xf32>
    %133 = arith.index_cast %84 : i32 to index
    %c0_57 = arith.constant 0 : index
    %134 = vector.load %arg14[%133, %c0_57] : memref<8x32xf32, #tpu.memory_space<vmem>>, vector<1x32xf32>
    tpu.vector_store %arg14[%133, %c0_57], %132 {strides = array<i32>} : memref<8x32xf32, #tpu.memory_space<vmem>>, vector<1x32xf32>,
    %c2_i32 = arith.constant 2 : i32
    %135 = arith.addi %0, %c2_i32 : i32
    %136 = arith.index_cast %135 : i32 to index
    %137 = memref.load %arg1[%136] : memref<16xi32, #tpu.memory_space<smem>>
    %138 = arith.addi %0, %c2_i32 : i32
    %139 = arith.index_cast %138 : i32 to index
    %140 = memref.load %arg2[%139] : memref<16xi32, #tpu.memory_space<smem>>
    %141 = arith.index_cast %137 : i32 to index
    %c0_58 = arith.constant 0 : index
    %142 = vector.load %arg13[%141, %c0_58] : memref<8x32xf32, #tpu.memory_space<vmem>>, vector<1x32xf32>
    %143 = arith.index_cast %137 : i32 to index
    %c0_59 = arith.constant 0 : index
    %144 = vector.load %arg14[%143, %c0_59] : memref<8x32xf32, #tpu.memory_space<vmem>>, vector<1x32xf32>
    %145 = arith.index_cast %137 : i32 to index
    %c0_60 = arith.constant 0 : index
    %146 = vector.load %arg11[%145, %c0_60] : memref<8x96xf32, #tpu.memory_space<vmem>>, vector<1x96xf32>
    %cst_61 = arith.constant dense<0.000000e+00> : vector<1x96xf32>
    %147 = tpu.matmul %142, %21, %cst_61 {dimension_numbers = #tpu.dot_dimension_numbers<[1], [0], [0], [1], [0, 0, 1, 1], [], []>} : vector<1x32xf32>, vector<32x96xf32>, vector<1x96xf32> -> vector<1x96xf32>
    %148 = arith.addf %146, %147 : vector<1x96xf32>
    %149 = vector.extract_strided_slice %148 {offsets = [0, 0], sizes = [1, 32], strides = [1, 1]} : vector<1x96xf32> to vector<1x32xf32>
    %150 = arith.negf %149 : vector<1x32xf32>
    %151 = math.exp %150 : vector<1x32xf32>
    %cst_62 = arith.constant 1.000000e+00 : f32
    %152 = vector.broadcast %cst_62 : f32 to vector<1x32xf32>
    %153 = arith.addf %152, %151 : vector<1x32xf32>
    %154 = arith.divf %152, %153 : vector<1x32xf32>
    %155 = vector.extract_strided_slice %148 {offsets = [0, 32], sizes = [1, 32], strides = [1, 1]} : vector<1x96xf32> to vector<1x32xf32>
    %156 = arith.negf %155 : vector<1x32xf32>
    %157 = math.exp %156 : vector<1x32xf32>
    %cst_63 = arith.constant 1.000000e+00 : f32
    %158 = vector.broadcast %cst_63 : f32 to vector<1x32xf32>
    %159 = arith.addf %158, %157 : vector<1x32xf32>
    %160 = arith.divf %158, %159 : vector<1x32xf32>
    %161 = vector.extract_strided_slice %148 {offsets = [0, 64], sizes = [1, 32], strides = [1, 1]} : vector<1x96xf32> to vector<1x32xf32>
    %162 = math.tanh %161 : vector<1x32xf32>
    %163 = arith.mulf %154, %162 : vector<1x32xf32>
    %164 = arith.addf %163, %144 : vector<1x32xf32>
    %165 = math.tanh %164 : vector<1x32xf32>
    %166 = arith.mulf %160, %165 : vector<1x32xf32>
    %c0_64 = arith.constant 0 : index
    %167 = arith.index_cast %137 : i32 to index
    %c0_65 = arith.constant 0 : index
    %168 = vector.load %arg10[%c0_64, %167, %c0_65] : memref<1x8x32xf32, #tpu.memory_space<vmem>>, vector<1x1x32xf32>
    %169 = vector.shape_cast %168 : vector<1x1x32xf32> to vector<1x32xf32>
    %170 = vector.shape_cast %166 : vector<1x32xf32> to vector<1x1x32xf32>
    tpu.vector_store %arg10[%c0_64, %167, %c0_65], %170 {strides = array<i32>} : memref<1x8x32xf32, #tpu.memory_space<vmem>>, vector<1x1x32xf32>,
    %171 = arith.index_cast %140 : i32 to index
    %c0_66 = arith.constant 0 : index
    %172 = vector.load %arg12[%171, %c0_66] : memref<8x32xf32, #tpu.memory_space<vmem>>, vector<1x32xf32>
    %cst_67 = arith.constant dense<0.000000e+00> : vector<1x32xf32>
    %173 = tpu.matmul %166, %22, %cst_67 {dimension_numbers = #tpu.dot_dimension_numbers<[1], [0], [0], [1], [0, 0, 1, 1], [], []>} : vector<1x32xf32>, vector<32x32xf32>, vector<1x32xf32> -> vector<1x32xf32>
    %174 = arith.addf %172, %173 : vector<1x32xf32>
    %175 = arith.negf %174 : vector<1x32xf32>
    %176 = math.exp %175 : vector<1x32xf32>
    %cst_68 = arith.constant 1.000000e+00 : f32
    %177 = vector.broadcast %cst_68 : f32 to vector<1x32xf32>
    %178 = arith.addf %177, %176 : vector<1x32xf32>
    %179 = arith.divf %177, %178 : vector<1x32xf32>
    %180 = arith.index_cast %140 : i32 to index
    %c0_69 = arith.constant 0 : index
    %181 = vector.load %arg13[%180, %c0_69] : memref<8x32xf32, #tpu.memory_space<vmem>>, vector<1x32xf32>
    %182 = arith.addf %181, %166 : vector<1x32xf32>
    %183 = arith.index_cast %140 : i32 to index
    %c0_70 = arith.constant 0 : index
    %184 = vector.load %arg13[%183, %c0_70] : memref<8x32xf32, #tpu.memory_space<vmem>>, vector<1x32xf32>
    tpu.vector_store %arg13[%183, %c0_70], %182 {strides = array<i32>} : memref<8x32xf32, #tpu.memory_space<vmem>>, vector<1x32xf32>,
    %185 = arith.index_cast %140 : i32 to index
    %c0_71 = arith.constant 0 : index
    %186 = vector.load %arg14[%185, %c0_71] : memref<8x32xf32, #tpu.memory_space<vmem>>, vector<1x32xf32>
    %187 = arith.mulf %179, %164 : vector<1x32xf32>
    %188 = arith.addf %186, %187 : vector<1x32xf32>
    %189 = arith.index_cast %140 : i32 to index
    %c0_72 = arith.constant 0 : index
    %190 = vector.load %arg14[%189, %c0_72] : memref<8x32xf32, #tpu.memory_space<vmem>>, vector<1x32xf32>
    tpu.vector_store %arg14[%189, %c0_72], %188 {strides = array<i32>} : memref<8x32xf32, #tpu.memory_space<vmem>>, vector<1x32xf32>,
    %c3_i32 = arith.constant 3 : i32
    %191 = arith.addi %0, %c3_i32 : i32
    %192 = arith.index_cast %191 : i32 to index
    %193 = memref.load %arg1[%192] : memref<16xi32, #tpu.memory_space<smem>>
    %194 = arith.addi %0, %c3_i32 : i32
    %195 = arith.index_cast %194 : i32 to index
    %196 = memref.load %arg2[%195] : memref<16xi32, #tpu.memory_space<smem>>
    %197 = arith.index_cast %193 : i32 to index
    %c0_73 = arith.constant 0 : index
    %198 = vector.load %arg13[%197, %c0_73] : memref<8x32xf32, #tpu.memory_space<vmem>>, vector<1x32xf32>
    %199 = arith.index_cast %193 : i32 to index
    %c0_74 = arith.constant 0 : index
    %200 = vector.load %arg14[%199, %c0_74] : memref<8x32xf32, #tpu.memory_space<vmem>>, vector<1x32xf32>
    %201 = arith.index_cast %193 : i32 to index
    %c0_75 = arith.constant 0 : index
    %202 = vector.load %arg11[%201, %c0_75] : memref<8x96xf32, #tpu.memory_space<vmem>>, vector<1x96xf32>
    %cst_76 = arith.constant dense<0.000000e+00> : vector<1x96xf32>
    %203 = tpu.matmul %198, %21, %cst_76 {dimension_numbers = #tpu.dot_dimension_numbers<[1], [0], [0], [1], [0, 0, 1, 1], [], []>} : vector<1x32xf32>, vector<32x96xf32>, vector<1x96xf32> -> vector<1x96xf32>
    %204 = arith.addf %202, %203 : vector<1x96xf32>
    %205 = vector.extract_strided_slice %204 {offsets = [0, 0], sizes = [1, 32], strides = [1, 1]} : vector<1x96xf32> to vector<1x32xf32>
    %206 = arith.negf %205 : vector<1x32xf32>
    %207 = math.exp %206 : vector<1x32xf32>
    %cst_77 = arith.constant 1.000000e+00 : f32
    %208 = vector.broadcast %cst_77 : f32 to vector<1x32xf32>
    %209 = arith.addf %208, %207 : vector<1x32xf32>
    %210 = arith.divf %208, %209 : vector<1x32xf32>
    %211 = vector.extract_strided_slice %204 {offsets = [0, 32], sizes = [1, 32], strides = [1, 1]} : vector<1x96xf32> to vector<1x32xf32>
    %212 = arith.negf %211 : vector<1x32xf32>
    %213 = math.exp %212 : vector<1x32xf32>
    %cst_78 = arith.constant 1.000000e+00 : f32
    %214 = vector.broadcast %cst_78 : f32 to vector<1x32xf32>
    %215 = arith.addf %214, %213 : vector<1x32xf32>
    %216 = arith.divf %214, %215 : vector<1x32xf32>
    %217 = vector.extract_strided_slice %204 {offsets = [0, 64], sizes = [1, 32], strides = [1, 1]} : vector<1x96xf32> to vector<1x32xf32>
    %218 = math.tanh %217 : vector<1x32xf32>
    %219 = arith.mulf %210, %218 : vector<1x32xf32>
    %220 = arith.addf %219, %200 : vector<1x32xf32>
    %221 = math.tanh %220 : vector<1x32xf32>
    %222 = arith.mulf %216, %221 : vector<1x32xf32>
    %c0_79 = arith.constant 0 : index
    %223 = arith.index_cast %193 : i32 to index
    %c0_80 = arith.constant 0 : index
    %224 = vector.load %arg10[%c0_79, %223, %c0_80] : memref<1x8x32xf32, #tpu.memory_space<vmem>>, vector<1x1x32xf32>
    %225 = vector.shape_cast %224 : vector<1x1x32xf32> to vector<1x32xf32>
    %226 = vector.shape_cast %222 : vector<1x32xf32> to vector<1x1x32xf32>
    tpu.vector_store %arg10[%c0_79, %223, %c0_80], %226 {strides = array<i32>} : memref<1x8x32xf32, #tpu.memory_space<vmem>>, vector<1x1x32xf32>,
    %227 = arith.index_cast %196 : i32 to index
    %c0_81 = arith.constant 0 : index
    %228 = vector.load %arg12[%227, %c0_81] : memref<8x32xf32, #tpu.memory_space<vmem>>, vector<1x32xf32>
    %cst_82 = arith.constant dense<0.000000e+00> : vector<1x32xf32>
    %229 = tpu.matmul %222, %22, %cst_82 {dimension_numbers = #tpu.dot_dimension_numbers<[1], [0], [0], [1], [0, 0, 1, 1], [], []>} : vector<1x32xf32>, vector<32x32xf32>, vector<1x32xf32> -> vector<1x32xf32>
    %230 = arith.addf %228, %229 : vector<1x32xf32>
    %231 = arith.negf %230 : vector<1x32xf32>
    %232 = math.exp %231 : vector<1x32xf32>
    %cst_83 = arith.constant 1.000000e+00 : f32
    %233 = vector.broadcast %cst_83 : f32 to vector<1x32xf32>
    %234 = arith.addf %233, %232 : vector<1x32xf32>
    %235 = arith.divf %233, %234 : vector<1x32xf32>
    %236 = arith.index_cast %196 : i32 to index
    %c0_84 = arith.constant 0 : index
    %237 = vector.load %arg13[%236, %c0_84] : memref<8x32xf32, #tpu.memory_space<vmem>>, vector<1x32xf32>
    %238 = arith.addf %237, %222 : vector<1x32xf32>
    %239 = arith.index_cast %196 : i32 to index
    %c0_85 = arith.constant 0 : index
    %240 = vector.load %arg13[%239, %c0_85] : memref<8x32xf32, #tpu.memory_space<vmem>>, vector<1x32xf32>
    tpu.vector_store %arg13[%239, %c0_85], %238 {strides = array<i32>} : memref<8x32xf32, #tpu.memory_space<vmem>>, vector<1x32xf32>,
    %241 = arith.index_cast %196 : i32 to index
    %c0_86 = arith.constant 0 : index
    %242 = vector.load %arg14[%241, %c0_86] : memref<8x32xf32, #tpu.memory_space<vmem>>, vector<1x32xf32>
    %243 = arith.mulf %235, %220 : vector<1x32xf32>
    %244 = arith.addf %242, %243 : vector<1x32xf32>
    %245 = arith.index_cast %196 : i32 to index
    %c0_87 = arith.constant 0 : index
    %246 = vector.load %arg14[%245, %c0_87] : memref<8x32xf32, #tpu.memory_space<vmem>>, vector<1x32xf32>
    tpu.vector_store %arg14[%245, %c0_87], %244 {strides = array<i32>} : memref<8x32xf32, #tpu.memory_space<vmem>>, vector<1x32xf32>,
    %c4_i32 = arith.constant 4 : i32
    %247 = arith.addi %0, %c4_i32 : i32
    %248 = arith.index_cast %247 : i32 to index
    %249 = memref.load %arg1[%248] : memref<16xi32, #tpu.memory_space<smem>>
    %250 = arith.addi %0, %c4_i32 : i32
    %251 = arith.index_cast %250 : i32 to index
    %252 = memref.load %arg2[%251] : memref<16xi32, #tpu.memory_space<smem>>
    %253 = arith.index_cast %249 : i32 to index
    %c0_88 = arith.constant 0 : index
    %254 = vector.load %arg13[%253, %c0_88] : memref<8x32xf32, #tpu.memory_space<vmem>>, vector<1x32xf32>
    %255 = arith.index_cast %249 : i32 to index
    %c0_89 = arith.constant 0 : index
    %256 = vector.load %arg14[%255, %c0_89] : memref<8x32xf32, #tpu.memory_space<vmem>>, vector<1x32xf32>
    %257 = arith.index_cast %249 : i32 to index
    %c0_90 = arith.constant 0 : index
    %258 = vector.load %arg11[%257, %c0_90] : memref<8x96xf32, #tpu.memory_space<vmem>>, vector<1x96xf32>
    %cst_91 = arith.constant dense<0.000000e+00> : vector<1x96xf32>
    %259 = tpu.matmul %254, %21, %cst_91 {dimension_numbers = #tpu.dot_dimension_numbers<[1], [0], [0], [1], [0, 0, 1, 1], [], []>} : vector<1x32xf32>, vector<32x96xf32>, vector<1x96xf32> -> vector<1x96xf32>
    %260 = arith.addf %258, %259 : vector<1x96xf32>
    %261 = vector.extract_strided_slice %260 {offsets = [0, 0], sizes = [1, 32], strides = [1, 1]} : vector<1x96xf32> to vector<1x32xf32>
    %262 = arith.negf %261 : vector<1x32xf32>
    %263 = math.exp %262 : vector<1x32xf32>
    %cst_92 = arith.constant 1.000000e+00 : f32
    %264 = vector.broadcast %cst_92 : f32 to vector<1x32xf32>
    %265 = arith.addf %264, %263 : vector<1x32xf32>
    %266 = arith.divf %264, %265 : vector<1x32xf32>
    %267 = vector.extract_strided_slice %260 {offsets = [0, 32], sizes = [1, 32], strides = [1, 1]} : vector<1x96xf32> to vector<1x32xf32>
    %268 = arith.negf %267 : vector<1x32xf32>
    %269 = math.exp %268 : vector<1x32xf32>
    %cst_93 = arith.constant 1.000000e+00 : f32
    %270 = vector.broadcast %cst_93 : f32 to vector<1x32xf32>
    %271 = arith.addf %270, %269 : vector<1x32xf32>
    %272 = arith.divf %270, %271 : vector<1x32xf32>
    %273 = vector.extract_strided_slice %260 {offsets = [0, 64], sizes = [1, 32], strides = [1, 1]} : vector<1x96xf32> to vector<1x32xf32>
    %274 = math.tanh %273 : vector<1x32xf32>
    %275 = arith.mulf %266, %274 : vector<1x32xf32>
    %276 = arith.addf %275, %256 : vector<1x32xf32>
    %277 = math.tanh %276 : vector<1x32xf32>
    %278 = arith.mulf %272, %277 : vector<1x32xf32>
    %c0_94 = arith.constant 0 : index
    %279 = arith.index_cast %249 : i32 to index
    %c0_95 = arith.constant 0 : index
    %280 = vector.load %arg10[%c0_94, %279, %c0_95] : memref<1x8x32xf32, #tpu.memory_space<vmem>>, vector<1x1x32xf32>
    %281 = vector.shape_cast %280 : vector<1x1x32xf32> to vector<1x32xf32>
    %282 = vector.shape_cast %278 : vector<1x32xf32> to vector<1x1x32xf32>
    tpu.vector_store %arg10[%c0_94, %279, %c0_95], %282 {strides = array<i32>} : memref<1x8x32xf32, #tpu.memory_space<vmem>>, vector<1x1x32xf32>,
    %283 = arith.index_cast %252 : i32 to index
    %c0_96 = arith.constant 0 : index
    %284 = vector.load %arg12[%283, %c0_96] : memref<8x32xf32, #tpu.memory_space<vmem>>, vector<1x32xf32>
    %cst_97 = arith.constant dense<0.000000e+00> : vector<1x32xf32>
    %285 = tpu.matmul %278, %22, %cst_97 {dimension_numbers = #tpu.dot_dimension_numbers<[1], [0], [0], [1], [0, 0, 1, 1], [], []>} : vector<1x32xf32>, vector<32x32xf32>, vector<1x32xf32> -> vector<1x32xf32>
    %286 = arith.addf %284, %285 : vector<1x32xf32>
    %287 = arith.negf %286 : vector<1x32xf32>
    %288 = math.exp %287 : vector<1x32xf32>
    %cst_98 = arith.constant 1.000000e+00 : f32
    %289 = vector.broadcast %cst_98 : f32 to vector<1x32xf32>
    %290 = arith.addf %289, %288 : vector<1x32xf32>
    %291 = arith.divf %289, %290 : vector<1x32xf32>
    %292 = arith.index_cast %252 : i32 to index
    %c0_99 = arith.constant 0 : index
    %293 = vector.load %arg13[%292, %c0_99] : memref<8x32xf32, #tpu.memory_space<vmem>>, vector<1x32xf32>
    %294 = arith.addf %293, %278 : vector<1x32xf32>
    %295 = arith.index_cast %252 : i32 to index
    %c0_100 = arith.constant 0 : index
    %296 = vector.load %arg13[%295, %c0_100] : memref<8x32xf32, #tpu.memory_space<vmem>>, vector<1x32xf32>
    tpu.vector_store %arg13[%295, %c0_100], %294 {strides = array<i32>} : memref<8x32xf32, #tpu.memory_space<vmem>>, vector<1x32xf32>,
    %297 = arith.index_cast %252 : i32 to index
    %c0_101 = arith.constant 0 : index
    %298 = vector.load %arg14[%297, %c0_101] : memref<8x32xf32, #tpu.memory_space<vmem>>, vector<1x32xf32>
    %299 = arith.mulf %291, %276 : vector<1x32xf32>
    %300 = arith.addf %298, %299 : vector<1x32xf32>
    %301 = arith.index_cast %252 : i32 to index
    %c0_102 = arith.constant 0 : index
    %302 = vector.load %arg14[%301, %c0_102] : memref<8x32xf32, #tpu.memory_space<vmem>>, vector<1x32xf32>
    tpu.vector_store %arg14[%301, %c0_102], %300 {strides = array<i32>} : memref<8x32xf32, #tpu.memory_space<vmem>>, vector<1x32xf32>,
    %c5_i32 = arith.constant 5 : i32
    %303 = arith.addi %0, %c5_i32 : i32
    %304 = arith.index_cast %303 : i32 to index
    %305 = memref.load %arg1[%304] : memref<16xi32, #tpu.memory_space<smem>>
    %306 = arith.addi %0, %c5_i32 : i32
    %307 = arith.index_cast %306 : i32 to index
    %308 = memref.load %arg2[%307] : memref<16xi32, #tpu.memory_space<smem>>
    %309 = arith.index_cast %305 : i32 to index
    %c0_103 = arith.constant 0 : index
    %310 = vector.load %arg13[%309, %c0_103] : memref<8x32xf32, #tpu.memory_space<vmem>>, vector<1x32xf32>
    %311 = arith.index_cast %305 : i32 to index
    %c0_104 = arith.constant 0 : index
    %312 = vector.load %arg14[%311, %c0_104] : memref<8x32xf32, #tpu.memory_space<vmem>>, vector<1x32xf32>
    %313 = arith.index_cast %305 : i32 to index
    %c0_105 = arith.constant 0 : index
    %314 = vector.load %arg11[%313, %c0_105] : memref<8x96xf32, #tpu.memory_space<vmem>>, vector<1x96xf32>
    %cst_106 = arith.constant dense<0.000000e+00> : vector<1x96xf32>
    %315 = tpu.matmul %310, %21, %cst_106 {dimension_numbers = #tpu.dot_dimension_numbers<[1], [0], [0], [1], [0, 0, 1, 1], [], []>} : vector<1x32xf32>, vector<32x96xf32>, vector<1x96xf32> -> vector<1x96xf32>
    %316 = arith.addf %314, %315 : vector<1x96xf32>
    %317 = vector.extract_strided_slice %316 {offsets = [0, 0], sizes = [1, 32], strides = [1, 1]} : vector<1x96xf32> to vector<1x32xf32>
    %318 = arith.negf %317 : vector<1x32xf32>
    %319 = math.exp %318 : vector<1x32xf32>
    %cst_107 = arith.constant 1.000000e+00 : f32
    %320 = vector.broadcast %cst_107 : f32 to vector<1x32xf32>
    %321 = arith.addf %320, %319 : vector<1x32xf32>
    %322 = arith.divf %320, %321 : vector<1x32xf32>
    %323 = vector.extract_strided_slice %316 {offsets = [0, 32], sizes = [1, 32], strides = [1, 1]} : vector<1x96xf32> to vector<1x32xf32>
    %324 = arith.negf %323 : vector<1x32xf32>
    %325 = math.exp %324 : vector<1x32xf32>
    %cst_108 = arith.constant 1.000000e+00 : f32
    %326 = vector.broadcast %cst_108 : f32 to vector<1x32xf32>
    %327 = arith.addf %326, %325 : vector<1x32xf32>
    %328 = arith.divf %326, %327 : vector<1x32xf32>
    %329 = vector.extract_strided_slice %316 {offsets = [0, 64], sizes = [1, 32], strides = [1, 1]} : vector<1x96xf32> to vector<1x32xf32>
    %330 = math.tanh %329 : vector<1x32xf32>
    %331 = arith.mulf %322, %330 : vector<1x32xf32>
    %332 = arith.addf %331, %312 : vector<1x32xf32>
    %333 = math.tanh %332 : vector<1x32xf32>
    %334 = arith.mulf %328, %333 : vector<1x32xf32>
    %c0_109 = arith.constant 0 : index
    %335 = arith.index_cast %305 : i32 to index
    %c0_110 = arith.constant 0 : index
    %336 = vector.load %arg10[%c0_109, %335, %c0_110] : memref<1x8x32xf32, #tpu.memory_space<vmem>>, vector<1x1x32xf32>
    %337 = vector.shape_cast %336 : vector<1x1x32xf32> to vector<1x32xf32>
    %338 = vector.shape_cast %334 : vector<1x32xf32> to vector<1x1x32xf32>
    tpu.vector_store %arg10[%c0_109, %335, %c0_110], %338 {strides = array<i32>} : memref<1x8x32xf32, #tpu.memory_space<vmem>>, vector<1x1x32xf32>,
    %339 = arith.index_cast %308 : i32 to index
    %c0_111 = arith.constant 0 : index
    %340 = vector.load %arg12[%339, %c0_111] : memref<8x32xf32, #tpu.memory_space<vmem>>, vector<1x32xf32>
    %cst_112 = arith.constant dense<0.000000e+00> : vector<1x32xf32>
    %341 = tpu.matmul %334, %22, %cst_112 {dimension_numbers = #tpu.dot_dimension_numbers<[1], [0], [0], [1], [0, 0, 1, 1], [], []>} : vector<1x32xf32>, vector<32x32xf32>, vector<1x32xf32> -> vector<1x32xf32>
    %342 = arith.addf %340, %341 : vector<1x32xf32>
    %343 = arith.negf %342 : vector<1x32xf32>
    %344 = math.exp %343 : vector<1x32xf32>
    %cst_113 = arith.constant 1.000000e+00 : f32
    %345 = vector.broadcast %cst_113 : f32 to vector<1x32xf32>
    %346 = arith.addf %345, %344 : vector<1x32xf32>
    %347 = arith.divf %345, %346 : vector<1x32xf32>
    %348 = arith.index_cast %308 : i32 to index
    %c0_114 = arith.constant 0 : index
    %349 = vector.load %arg13[%348, %c0_114] : memref<8x32xf32, #tpu.memory_space<vmem>>, vector<1x32xf32>
    %350 = arith.addf %349, %334 : vector<1x32xf32>
    %351 = arith.index_cast %308 : i32 to index
    %c0_115 = arith.constant 0 : index
    %352 = vector.load %arg13[%351, %c0_115] : memref<8x32xf32, #tpu.memory_space<vmem>>, vector<1x32xf32>
    tpu.vector_store %arg13[%351, %c0_115], %350 {strides = array<i32>} : memref<8x32xf32, #tpu.memory_space<vmem>>, vector<1x32xf32>,
    %353 = arith.index_cast %308 : i32 to index
    %c0_116 = arith.constant 0 : index
    %354 = vector.load %arg14[%353, %c0_116] : memref<8x32xf32, #tpu.memory_space<vmem>>, vector<1x32xf32>
    %355 = arith.mulf %347, %332 : vector<1x32xf32>
    %356 = arith.addf %354, %355 : vector<1x32xf32>
    %357 = arith.index_cast %308 : i32 to index
    %c0_117 = arith.constant 0 : index
    %358 = vector.load %arg14[%357, %c0_117] : memref<8x32xf32, #tpu.memory_space<vmem>>, vector<1x32xf32>
    tpu.vector_store %arg14[%357, %c0_117], %356 {strides = array<i32>} : memref<8x32xf32, #tpu.memory_space<vmem>>, vector<1x32xf32>,
    %c6_i32 = arith.constant 6 : i32
    %359 = arith.addi %0, %c6_i32 : i32
    %360 = arith.index_cast %359 : i32 to index
    %361 = memref.load %arg1[%360] : memref<16xi32, #tpu.memory_space<smem>>
    %362 = arith.addi %0, %c6_i32 : i32
    %363 = arith.index_cast %362 : i32 to index
    %364 = memref.load %arg2[%363] : memref<16xi32, #tpu.memory_space<smem>>
    %365 = arith.index_cast %361 : i32 to index
    %c0_118 = arith.constant 0 : index
    %366 = vector.load %arg13[%365, %c0_118] : memref<8x32xf32, #tpu.memory_space<vmem>>, vector<1x32xf32>
    %367 = arith.index_cast %361 : i32 to index
    %c0_119 = arith.constant 0 : index
    %368 = vector.load %arg14[%367, %c0_119] : memref<8x32xf32, #tpu.memory_space<vmem>>, vector<1x32xf32>
    %369 = arith.index_cast %361 : i32 to index
    %c0_120 = arith.constant 0 : index
    %370 = vector.load %arg11[%369, %c0_120] : memref<8x96xf32, #tpu.memory_space<vmem>>, vector<1x96xf32>
    %cst_121 = arith.constant dense<0.000000e+00> : vector<1x96xf32>
    %371 = tpu.matmul %366, %21, %cst_121 {dimension_numbers = #tpu.dot_dimension_numbers<[1], [0], [0], [1], [0, 0, 1, 1], [], []>} : vector<1x32xf32>, vector<32x96xf32>, vector<1x96xf32> -> vector<1x96xf32>
    %372 = arith.addf %370, %371 : vector<1x96xf32>
    %373 = vector.extract_strided_slice %372 {offsets = [0, 0], sizes = [1, 32], strides = [1, 1]} : vector<1x96xf32> to vector<1x32xf32>
    %374 = arith.negf %373 : vector<1x32xf32>
    %375 = math.exp %374 : vector<1x32xf32>
    %cst_122 = arith.constant 1.000000e+00 : f32
    %376 = vector.broadcast %cst_122 : f32 to vector<1x32xf32>
    %377 = arith.addf %376, %375 : vector<1x32xf32>
    %378 = arith.divf %376, %377 : vector<1x32xf32>
    %379 = vector.extract_strided_slice %372 {offsets = [0, 32], sizes = [1, 32], strides = [1, 1]} : vector<1x96xf32> to vector<1x32xf32>
    %380 = arith.negf %379 : vector<1x32xf32>
    %381 = math.exp %380 : vector<1x32xf32>
    %cst_123 = arith.constant 1.000000e+00 : f32
    %382 = vector.broadcast %cst_123 : f32 to vector<1x32xf32>
    %383 = arith.addf %382, %381 : vector<1x32xf32>
    %384 = arith.divf %382, %383 : vector<1x32xf32>
    %385 = vector.extract_strided_slice %372 {offsets = [0, 64], sizes = [1, 32], strides = [1, 1]} : vector<1x96xf32> to vector<1x32xf32>
    %386 = math.tanh %385 : vector<1x32xf32>
    %387 = arith.mulf %378, %386 : vector<1x32xf32>
    %388 = arith.addf %387, %368 : vector<1x32xf32>
    %389 = math.tanh %388 : vector<1x32xf32>
    %390 = arith.mulf %384, %389 : vector<1x32xf32>
    %c0_124 = arith.constant 0 : index
    %391 = arith.index_cast %361 : i32 to index
    %c0_125 = arith.constant 0 : index
    %392 = vector.load %arg10[%c0_124, %391, %c0_125] : memref<1x8x32xf32, #tpu.memory_space<vmem>>, vector<1x1x32xf32>
    %393 = vector.shape_cast %392 : vector<1x1x32xf32> to vector<1x32xf32>
    %394 = vector.shape_cast %390 : vector<1x32xf32> to vector<1x1x32xf32>
    tpu.vector_store %arg10[%c0_124, %391, %c0_125], %394 {strides = array<i32>} : memref<1x8x32xf32, #tpu.memory_space<vmem>>, vector<1x1x32xf32>,
    %395 = arith.index_cast %364 : i32 to index
    %c0_126 = arith.constant 0 : index
    %396 = vector.load %arg12[%395, %c0_126] : memref<8x32xf32, #tpu.memory_space<vmem>>, vector<1x32xf32>
    %cst_127 = arith.constant dense<0.000000e+00> : vector<1x32xf32>
    %397 = tpu.matmul %390, %22, %cst_127 {dimension_numbers = #tpu.dot_dimension_numbers<[1], [0], [0], [1], [0, 0, 1, 1], [], []>} : vector<1x32xf32>, vector<32x32xf32>, vector<1x32xf32> -> vector<1x32xf32>
    %398 = arith.addf %396, %397 : vector<1x32xf32>
    %399 = arith.negf %398 : vector<1x32xf32>
    %400 = math.exp %399 : vector<1x32xf32>
    %cst_128 = arith.constant 1.000000e+00 : f32
    %401 = vector.broadcast %cst_128 : f32 to vector<1x32xf32>
    %402 = arith.addf %401, %400 : vector<1x32xf32>
    %403 = arith.divf %401, %402 : vector<1x32xf32>
    %404 = arith.index_cast %364 : i32 to index
    %c0_129 = arith.constant 0 : index
    %405 = vector.load %arg13[%404, %c0_129] : memref<8x32xf32, #tpu.memory_space<vmem>>, vector<1x32xf32>
    %406 = arith.addf %405, %390 : vector<1x32xf32>
    %407 = arith.index_cast %364 : i32 to index
    %c0_130 = arith.constant 0 : index
    %408 = vector.load %arg13[%407, %c0_130] : memref<8x32xf32, #tpu.memory_space<vmem>>, vector<1x32xf32>
    tpu.vector_store %arg13[%407, %c0_130], %406 {strides = array<i32>} : memref<8x32xf32, #tpu.memory_space<vmem>>, vector<1x32xf32>,
    %409 = arith.index_cast %364 : i32 to index
    %c0_131 = arith.constant 0 : index
    %410 = vector.load %arg14[%409, %c0_131] : memref<8x32xf32, #tpu.memory_space<vmem>>, vector<1x32xf32>
    %411 = arith.mulf %403, %388 : vector<1x32xf32>
    %412 = arith.addf %410, %411 : vector<1x32xf32>
    %413 = arith.index_cast %364 : i32 to index
    %c0_132 = arith.constant 0 : index
    %414 = vector.load %arg14[%413, %c0_132] : memref<8x32xf32, #tpu.memory_space<vmem>>, vector<1x32xf32>
    tpu.vector_store %arg14[%413, %c0_132], %412 {strides = array<i32>} : memref<8x32xf32, #tpu.memory_space<vmem>>, vector<1x32xf32>,
    %c7_i32 = arith.constant 7 : i32
    %415 = arith.addi %0, %c7_i32 : i32
    %416 = arith.index_cast %415 : i32 to index
    %417 = memref.load %arg1[%416] : memref<16xi32, #tpu.memory_space<smem>>
    %418 = arith.addi %0, %c7_i32 : i32
    %419 = arith.index_cast %418 : i32 to index
    %420 = memref.load %arg2[%419] : memref<16xi32, #tpu.memory_space<smem>>
    %421 = arith.index_cast %417 : i32 to index
    %c0_133 = arith.constant 0 : index
    %422 = vector.load %arg13[%421, %c0_133] : memref<8x32xf32, #tpu.memory_space<vmem>>, vector<1x32xf32>
    %423 = arith.index_cast %417 : i32 to index
    %c0_134 = arith.constant 0 : index
    %424 = vector.load %arg14[%423, %c0_134] : memref<8x32xf32, #tpu.memory_space<vmem>>, vector<1x32xf32>
    %425 = arith.index_cast %417 : i32 to index
    %c0_135 = arith.constant 0 : index
    %426 = vector.load %arg11[%425, %c0_135] : memref<8x96xf32, #tpu.memory_space<vmem>>, vector<1x96xf32>
    %cst_136 = arith.constant dense<0.000000e+00> : vector<1x96xf32>
    %427 = tpu.matmul %422, %21, %cst_136 {dimension_numbers = #tpu.dot_dimension_numbers<[1], [0], [0], [1], [0, 0, 1, 1], [], []>} : vector<1x32xf32>, vector<32x96xf32>, vector<1x96xf32> -> vector<1x96xf32>
    %428 = arith.addf %426, %427 : vector<1x96xf32>
    %429 = vector.extract_strided_slice %428 {offsets = [0, 0], sizes = [1, 32], strides = [1, 1]} : vector<1x96xf32> to vector<1x32xf32>
    %430 = arith.negf %429 : vector<1x32xf32>
    %431 = math.exp %430 : vector<1x32xf32>
    %cst_137 = arith.constant 1.000000e+00 : f32
    %432 = vector.broadcast %cst_137 : f32 to vector<1x32xf32>
    %433 = arith.addf %432, %431 : vector<1x32xf32>
    %434 = arith.divf %432, %433 : vector<1x32xf32>
    %435 = vector.extract_strided_slice %428 {offsets = [0, 32], sizes = [1, 32], strides = [1, 1]} : vector<1x96xf32> to vector<1x32xf32>
    %436 = arith.negf %435 : vector<1x32xf32>
    %437 = math.exp %436 : vector<1x32xf32>
    %cst_138 = arith.constant 1.000000e+00 : f32
    %438 = vector.broadcast %cst_138 : f32 to vector<1x32xf32>
    %439 = arith.addf %438, %437 : vector<1x32xf32>
    %440 = arith.divf %438, %439 : vector<1x32xf32>
    %441 = vector.extract_strided_slice %428 {offsets = [0, 64], sizes = [1, 32], strides = [1, 1]} : vector<1x96xf32> to vector<1x32xf32>
    %442 = math.tanh %441 : vector<1x32xf32>
    %443 = arith.mulf %434, %442 : vector<1x32xf32>
    %444 = arith.addf %443, %424 : vector<1x32xf32>
    %445 = math.tanh %444 : vector<1x32xf32>
    %446 = arith.mulf %440, %445 : vector<1x32xf32>
    %c0_139 = arith.constant 0 : index
    %447 = arith.index_cast %417 : i32 to index
    %c0_140 = arith.constant 0 : index
    %448 = vector.load %arg10[%c0_139, %447, %c0_140] : memref<1x8x32xf32, #tpu.memory_space<vmem>>, vector<1x1x32xf32>
    %449 = vector.shape_cast %448 : vector<1x1x32xf32> to vector<1x32xf32>
    %450 = vector.shape_cast %446 : vector<1x32xf32> to vector<1x1x32xf32>
    tpu.vector_store %arg10[%c0_139, %447, %c0_140], %450 {strides = array<i32>} : memref<1x8x32xf32, #tpu.memory_space<vmem>>, vector<1x1x32xf32>,
    %451 = arith.index_cast %420 : i32 to index
    %c0_141 = arith.constant 0 : index
    %452 = vector.load %arg12[%451, %c0_141] : memref<8x32xf32, #tpu.memory_space<vmem>>, vector<1x32xf32>
    %cst_142 = arith.constant dense<0.000000e+00> : vector<1x32xf32>
    %453 = tpu.matmul %446, %22, %cst_142 {dimension_numbers = #tpu.dot_dimension_numbers<[1], [0], [0], [1], [0, 0, 1, 1], [], []>} : vector<1x32xf32>, vector<32x32xf32>, vector<1x32xf32> -> vector<1x32xf32>
    %454 = arith.addf %452, %453 : vector<1x32xf32>
    %455 = arith.negf %454 : vector<1x32xf32>
    %456 = math.exp %455 : vector<1x32xf32>
    %cst_143 = arith.constant 1.000000e+00 : f32
    %457 = vector.broadcast %cst_143 : f32 to vector<1x32xf32>
    %458 = arith.addf %457, %456 : vector<1x32xf32>
    %459 = arith.divf %457, %458 : vector<1x32xf32>
    %460 = arith.index_cast %420 : i32 to index
    %c0_144 = arith.constant 0 : index
    %461 = vector.load %arg13[%460, %c0_144] : memref<8x32xf32, #tpu.memory_space<vmem>>, vector<1x32xf32>
    %462 = arith.addf %461, %446 : vector<1x32xf32>
    %463 = arith.index_cast %420 : i32 to index
    %c0_145 = arith.constant 0 : index
    %464 = vector.load %arg13[%463, %c0_145] : memref<8x32xf32, #tpu.memory_space<vmem>>, vector<1x32xf32>
    tpu.vector_store %arg13[%463, %c0_145], %462 {strides = array<i32>} : memref<8x32xf32, #tpu.memory_space<vmem>>, vector<1x32xf32>,
    %465 = arith.index_cast %420 : i32 to index
    %c0_146 = arith.constant 0 : index
    %466 = vector.load %arg14[%465, %c0_146] : memref<8x32xf32, #tpu.memory_space<vmem>>, vector<1x32xf32>
    %467 = arith.mulf %459, %444 : vector<1x32xf32>
    %468 = arith.addf %466, %467 : vector<1x32xf32>
    %469 = arith.index_cast %420 : i32 to index
    %c0_147 = arith.constant 0 : index
    %470 = vector.load %arg14[%469, %c0_147] : memref<8x32xf32, #tpu.memory_space<vmem>>, vector<1x32xf32>
    tpu.vector_store %arg14[%469, %c0_147], %468 {strides = array<i32>} : memref<8x32xf32, #tpu.memory_space<vmem>>, vector<1x32xf32>,
    %c8_i32_148 = arith.constant 8 : i32
    return
  }
  func.func @transform_0(%arg0: i32, %arg1: memref<16xi32, #tpu.memory_space<smem>>, %arg2: memref<16xi32, #tpu.memory_space<smem>>) -> (i32, i32, i32) {
    %c0_i32 = arith.constant 0 : i32
    %c0_i32_0 = arith.constant 0 : i32
    %c0_i32_1 = arith.constant 0 : i32
    return %arg0, %c0_i32, %c0_i32_0 : i32, i32, i32
  }
  func.func @transform_1(%arg0: i32, %arg1: memref<16xi32, #tpu.memory_space<smem>>, %arg2: memref<16xi32, #tpu.memory_space<smem>>) -> (i32, i32) {
    %c0_i32 = arith.constant 0 : i32
    %c0_i32_0 = arith.constant 0 : i32
    %c0_i32_1 = arith.constant 0 : i32
    return %c0_i32, %c0_i32_0 : i32, i32
  }
  func.func @transform_2(%arg0: i32, %arg1: memref<16xi32, #tpu.memory_space<smem>>, %arg2: memref<16xi32, #tpu.memory_space<smem>>) -> (i32, i32) {
    %c0_i32 = arith.constant 0 : i32
    %c0_i32_0 = arith.constant 0 : i32
    %c0_i32_1 = arith.constant 0 : i32
    return %c0_i32, %c0_i32_0 : i32, i32
  }
  func.func @transform_3(%arg0: i32, %arg1: memref<16xi32, #tpu.memory_space<smem>>, %arg2: memref<16xi32, #tpu.memory_space<smem>>) -> (i32, i32) {
    %c0_i32 = arith.constant 0 : i32
    %c0_i32_0 = arith.constant 0 : i32
    %c0_i32_1 = arith.constant 0 : i32
    return %c0_i32, %c0_i32_0 : i32, i32
  }
  func.func @transform_4(%arg0: i32, %arg1: memref<16xi32, #tpu.memory_space<smem>>, %arg2: memref<16xi32, #tpu.memory_space<smem>>) -> (i32, i32) {
    %c0_i32 = arith.constant 0 : i32
    %c0_i32_0 = arith.constant 0 : i32
    %c0_i32_1 = arith.constant 0 : i32
    return %c0_i32, %c0_i32_0 : i32, i32
  }
  func.func @transform_5(%arg0: i32, %arg1: memref<16xi32, #tpu.memory_space<smem>>, %arg2: memref<16xi32, #tpu.memory_space<smem>>) -> (i32, i32) {
    %c0_i32 = arith.constant 0 : i32
    %c0_i32_0 = arith.constant 0 : i32
    %c0_i32_1 = arith.constant 0 : i32
    return %c0_i32, %c0_i32_0 : i32, i32
  }
  func.func @transform_6(%arg0: i32, %arg1: memref<16xi32, #tpu.memory_space<smem>>, %arg2: memref<16xi32, #tpu.memory_space<smem>>) -> (i32, i32) {
    %c0_i32 = arith.constant 0 : i32
    %c0_i32_0 = arith.constant 0 : i32
    %c0_i32_1 = arith.constant 0 : i32
    return %c0_i32, %c0_i32_0 : i32, i32
  }
  func.func @transform_7(%arg0: i32, %arg1: memref<16xi32, #tpu.memory_space<smem>>, %arg2: memref<16xi32, #tpu.memory_space<smem>>) -> (i32, i32, i32) {
    %c0_i32 = arith.constant 0 : i32
    %c0_i32_0 = arith.constant 0 : i32
    %c0_i32_1 = arith.constant 0 : i32
    return %arg0, %c0_i32, %c0_i32_0 : i32, i32, i32
  }
}

</mosaic_0001>

<llo_original>
// kernel: tpu_custom_call.1
$region0: #{tpu_custom_call.1}
  #allocation0 [shape = 'u32[]', space=smem, size = 0x4, offset = 0x4, fixed_abs, tag = 'smem constant byte address 0x4 - core index']
  #allocation1 [shape = 'u32[72,128]{1,0:T(1,128)}', space=vmem, size = 0x9000, scoped, tag = 'internal scratch']
  #allocation2 [shape = 'f32[8,96]{1,0:T(8,128)}', space=vmem, size = 0x1000, scoped, tag = 'scratch operand']
  #allocation3 [shape = 'f32[8,32]{1,0:T(8,128)}', space=vmem, size = 0x1000, scoped, tag = 'scratch operand']
  #allocation4 [shape = 'f32[8,32]{1,0:T(8,128)}', space=vmem, size = 0x1000, scoped, tag = 'scratch operand']
  #allocation5 [shape = 'f32[8,32]{1,0:T(8,128)}', space=vmem, size = 0x1000, scoped, tag = 'scratch operand']
  #allocation6 [shape = 's32[1]{0}', space=sflag, size = 0x4, scoped, tag = 'scoped memory for tpu_custom_call.1']
  #allocation7 [shape = 'u8[512]{0}', space=smem, size = 0x200, scoped, tag = 'prefetched SMEM operand 0']
  #allocation8 [shape = 'u8[512]{0}', space=smem, size = 0x200, scoped, tag = 'prefetched SMEM operand 1']
  %s0 = inlined_call_operand.hbm [shape: s32[16], index: 0, kind: input, shape index: {}]
  %s1 = inlined_call_operand.hbm [shape: s32[16], index: 1, kind: input, shape index: {}]
  %s2 = inlined_call_operand.hbm [shape: f32[2,8,32], index: 2, kind: input, shape index: {}]
  %s3 = inlined_call_operand.hbm [shape: f32[32,96], index: 3, kind: input, shape index: {}]
  %s4 = inlined_call_operand.vmem [shape: f32[1,96], index: 4, kind: input, shape index: {}]
  %s5 = inlined_call_operand.hbm [shape: f32[32,32], index: 5, kind: input, shape index: {}]
  %s6 = inlined_call_operand.vmem [shape: f32[1,32], index: 6, kind: input, shape index: {}]
  %s7 = inlined_call_operand.hbm [shape: f32[32,96], index: 7, kind: input, shape index: {}]
  %s8 = inlined_call_operand.hbm [shape: f32[32,32], index: 8, kind: input, shape index: {}]
  %s9 = inlined_call_operand.hbm [shape: f32[2,8,32], index: 9, kind: output, shape index: {}]
  %s10 = sld [smem:[#allocation0]]
  $region81: #{tpu_custom_call.1} parent=0
    _
  %s12 = ssub.s32 1, %s10
  %s13 = scalar_select 0, %s12, %s10
  %s15 = sshll.u32 %s0, 4
  %s16 = int_to_ptr.hbm [resolvable:$true] %s15
  %18 = dma.hbm_to_smem %s16, 16, [#allocation7], [#allocation6]
  %s20 = sshll.u32 %s1, 4
  %s21 = int_to_ptr.hbm [resolvable:$true] %s20
  %23 = dma.hbm_to_smem %s21, 16, [#allocation8], [#allocation6]
  %25 = dma.done [#allocation6], 32
  %26 = sfence
  $region1: #{tpu_custom_call.1} parent=0
    #allocation9 [shape = 'u8[8192]{0}', space=vmem, size = 0x2000, scoped, tag = 'input window, operand 2']
    #allocation10 [shape = 's32[2]{0}', space=sflag, size = 0x8, scoped, tag = 'scoped memory for tpu_custom_call.1']
    #allocation11 [shape = 's32[2]{0}', space=sflag, size = 0x8, scoped, tag = 'scoped memory for tpu_custom_call.1']
    #allocation12 [shape = 'u8[16384]{0}', space=vmem, size = 0x4000, scoped, tag = 'input window, operand 3, single buffered']
    #allocation13 [shape = 's32[1]{0}', space=sflag, size = 0x4, scoped, tag = 'scoped memory for tpu_custom_call.1']
    #allocation14 [shape = 'u8[16384]{0}', space=vmem, size = 0x4000, scoped, tag = 'input window, operand 5, single buffered']
    #allocation15 [shape = 'u8[16384]{0}', space=vmem, size = 0x4000, scoped, tag = 'input window, operand 7, single buffered']
    #allocation16 [shape = 's32[1]{0}', space=sflag, size = 0x4, scoped, tag = 'scoped memory for tpu_custom_call.1']
    #allocation17 [shape = 'u8[16384]{0}', space=vmem, size = 0x4000, scoped, tag = 'input window, operand 8, single buffered']
    #allocation18 [shape = 'u8[8192]{0}', space=vmem, size = 0x2000, scoped, tag = 'output window, operand 0']
    %27 = vsyncpa [#allocation10], 0
    %s28 = scalar_lea.sflag [#allocation10], 1
    %29 = vsyncpa %s28, 0
    %30 = vsyncpa [#allocation13], 0
    %31 = vsyncpa [#allocation16], 0
    %32 = vsyncpa [#allocation11], 0
    %s33 = scalar_lea.sflag [#allocation11], 1
    %34 = vsyncpa %s33, 0
    loop: start=0, step=1, limit=4
    $region2: #{tpu_custom_call.1} parent=1 // loop_pre_header
      _
    $region3: #{tpu_custom_call.1} parent=1 // loop_header
      %s36 = sphi 0, %s40
      %p37 = scmp.ge.s32.totalorder %s36, 4
      %s46 = sphi 0, %s48
      %s49 = sphi 0, %s46
      %s50 = sphi 0, %s49
      %s66 = sphi 0, %s50
      %s70 = sphi 0, %s70
      %s72 = sphi 0, %s70
      %s73 = sphi 0, %s72
      %s87 = sphi 0, %s73
      %s91 = sphi 0, %s91
      %s93 = sphi 0, %s91
      %s94 = sphi 0, %s93
      %s108 = sphi 0, %s94
      %s112 = sphi 0, %s112
      %s114 = sphi 0, %s112
      %s115 = sphi 0, %s114
      %s129 = sphi 0, %s115
      %s133 = sphi 0, %s133
      %s135 = sphi 0, %s133
      %s136 = sphi 0, %s135
      %s150 = sphi 0, %s136
      %s154 = sphi 0, %s154
      %s156 = sphi 0, %s154
      %s157 = sphi 0, %s156
      %s171 = sphi 0, %s157
      %s175 = sphi 0, %s175
      %s177 = sphi 0, %s175
      %s178 = sphi 0, %s177
      %s192 = sphi 0, %s178
      %s198 = sphi 0, %s200
      %s201 = sphi 0, %s198
      %s202 = sphi 0, %s201
      %s218 = sphi 0, %s202
    $region4: #{tpu_custom_call.1} parent=1 // loop_header_branch
      %39 = sbr.rel (%p37) target = $region8
    $region5: #{tpu_custom_call.1} parent=1 // loop_body
      %s41 = ssub.s32 %s36, 1
      %s42 = ssub.s32 %s36, 2
      %s43 = sadd.s32 %s36, 1
      %s44 = ssub.s32 %s36, %s43
      %p45 = scmp.eq.s32.totalorder %s44, 0
      %s47 = sadd.s32 %s46, 1
      %s48 = scalar_select %p45, %s46, %s47
      %p51 = pneg %p45
      %p52 = scmp.eq.s32.totalorder %s36, 1
      %p53 = por %p51, %p52
      %p54 = scmp.ne.s32.totalorder %s46, %s49
      %p55 = scmp.eq.s32.totalorder %s36, 0
      %p56 = por %p54, %p55
      %p57 = scmp.ne.s32.totalorder %s46, %s49
      %p58 = scmp.eq.s32.totalorder %s41, 1
      %p59 = por %p57, %p58
      %p60 = scmp.ne.s32.totalorder %s49, %s50
      %p61 = scmp.eq.s32.totalorder %s41, 0
      %p62 = por %p60, %p61
      %p63 = scmp.ne.s32.totalorder %s49, %s50
      %p64 = scmp.eq.s32.totalorder %s42, 1
      %p65 = por %p63, %p64
      %p67 = scmp.ne.s32.totalorder %s50, %s66
      %p68 = scmp.eq.s32.totalorder %s42, 0
      %p69 = por %p67, %p68
      %s71 = sadd.s32 %s70, 1
      %p74 = scmp.eq.s32.totalorder %s36, 1
      %p75 = scmp.ne.s32.totalorder %s70, %s72
      %p76 = scmp.eq.s32.totalorder %s36, 0
      %p77 = por %p75, %p76
      %p78 = scmp.ne.s32.totalorder %s70, %s72
      %p79 = scmp.eq.s32.totalorder %s41, 1
      %p80 = por %p78, %p79
      %p81 = scmp.ne.s32.totalorder %s72, %s73
      %p82 = scmp.eq.s32.totalorder %s41, 0
      %p83 = por %p81, %p82
      %p84 = scmp.ne.s32.totalorder %s72, %s73
      %p85 = scmp.eq.s32.totalorder %s42, 1
      %p86 = por %p84, %p85
      %p88 = scmp.ne.s32.totalorder %s73, %s87
      %p89 = scmp.eq.s32.totalorder %s42, 0
      %p90 = por %p88, %p89
      %s92 = sadd.s32 %s91, 1
      %p95 = scmp.eq.s32.totalorder %s36, 1
      %p96 = scmp.ne.s32.totalorder %s91, %s93
      %p97 = scmp.eq.s32.totalorder %s36, 0
      %p98 = por %p96, %p97
      %p99 = scmp.ne.s32.totalorder %s91, %s93
      %p100 = scmp.eq.s32.totalorder %s41, 1
      %p101 = por %p99, %p100
      %p102 = scmp.ne.s32.totalorder %s93, %s94
      %p103 = scmp.eq.s32.totalorder %s41, 0
      %p104 = por %p102, %p103
      %p105 = scmp.ne.s32.totalorder %s93, %s94
      %p106 = scmp.eq.s32.totalorder %s42, 1
      %p107 = por %p105, %p106
      %p109 = scmp.ne.s32.totalorder %s94, %s108
      %p110 = scmp.eq.s32.totalorder %s42, 0
      %p111 = por %p109, %p110
      %s113 = sadd.s32 %s112, 1
      %p116 = scmp.eq.s32.totalorder %s36, 1
      %p117 = scmp.ne.s32.totalorder %s112, %s114
      %p118 = scmp.eq.s32.totalorder %s36, 0
      %p119 = por %p117, %p118
      %p120 = scmp.ne.s32.totalorder %s112, %s114
      %p121 = scmp.eq.s32.totalorder %s41, 1
      %p122 = por %p120, %p121
      %p123 = scmp.ne.s32.totalorder %s114, %s115
      %p124 = scmp.eq.s32.totalorder %s41, 0
      %p125 = por %p123, %p124
      %p126 = scmp.ne.s32.totalorder %s114, %s115
      %p127 = scmp.eq.s32.totalorder %s42, 1
      %p128 = por %p126, %p127
      %p130 = scmp.ne.s32.totalorder %s115, %s129
      %p131 = scmp.eq.s32.totalorder %s42, 0
      %p132 = por %p130, %p131
      %s134 = sadd.s32 %s133, 1
      %p137 = scmp.eq.s32.totalorder %s36, 1
      %p138 = scmp.ne.s32.totalorder %s133, %s135
      %p139 = scmp.eq.s32.totalorder %s36, 0
      %p140 = por %p138, %p139
      %p141 = scmp.ne.s32.totalorder %s133, %s135
      %p142 = scmp.eq.s32.totalorder %s41, 1
      %p143 = por %p141, %p142
      %p144 = scmp.ne.s32.totalorder %s135, %s136
      %p145 = scmp.eq.s32.totalorder %s41, 0
      %p146 = por %p144, %p145
      %p147 = scmp.ne.s32.totalorder %s135, %s136
      %p148 = scmp.eq.s32.totalorder %s42, 1
      %p149 = por %p147, %p148
      %p151 = scmp.ne.s32.totalorder %s136, %s150
      %p152 = scmp.eq.s32.totalorder %s42, 0
      %p153 = por %p151, %p152
      %s155 = sadd.s32 %s154, 1
      %p158 = scmp.eq.s32.totalorder %s36, 1
      %p159 = scmp.ne.s32.totalorder %s154, %s156
      %p160 = scmp.eq.s32.totalorder %s36, 0
      %p161 = por %p159, %p160
      %p162 = scmp.ne.s32.totalorder %s154, %s156
      %p163 = scmp.eq.s32.totalorder %s41, 1
      %p164 = por %p162, %p163
      %p165 = scmp.ne.s32.totalorder %s156, %s157
      %p166 = scmp.eq.s32.totalorder %s41, 0
      %p167 = por %p165, %p166
      %p168 = scmp.ne.s32.totalorder %s156, %s157
      %p169 = scmp.eq.s32.totalorder %s42, 1
      %p170 = por %p168, %p169
      %p172 = scmp.ne.s32.totalorder %s157, %s171
      %p173 = scmp.eq.s32.totalorder %s42, 0
      %p174 = por %p172, %p173
      %s176 = sadd.s32 %s175, 1
      %p179 = scmp.eq.s32.totalorder %s36, 1
      %p180 = scmp.ne.s32.totalorder %s175, %s177
      %p181 = scmp.eq.s32.totalorder %s36, 0
      %p182 = por %p180, %p181
      %p183 = scmp.ne.s32.totalorder %s175, %s177
      %p184 = scmp.eq.s32.totalorder %s41, 1
      %p185 = por %p183, %p184
      %p186 = scmp.ne.s32.totalorder %s177, %s178
      %p187 = scmp.eq.s32.totalorder %s41, 0
      %p188 = por %p186, %p187
      %p189 = scmp.ne.s32.totalorder %s177, %s178
      %p190 = scmp.eq.s32.totalorder %s42, 1
      %p191 = por %p189, %p190
      %p193 = scmp.ne.s32.totalorder %s178, %s192
      %p194 = scmp.eq.s32.totalorder %s42, 0
      %p195 = por %p193, %p194
      %s196 = ssub.s32 %s36, %s43
      %p197 = scmp.eq.s32.totalorder %s196, 0
      %s199 = sadd.s32 %s198, 1
      %s200 = scalar_select %p197, %s198, %s199
      %p203 = pneg %p197
      %p204 = scmp.eq.s32.totalorder %s36, 1
      %p205 = por %p203, %p204
      %p206 = scmp.ne.s32.totalorder %s198, %s201
      %p207 = scmp.eq.s32.totalorder %s36, 0
      %p208 = por %p206, %p207
      %p209 = scmp.ne.s32.totalorder %s198, %s201
      %p210 = scmp.eq.s32.totalorder %s41, 1
      %p211 = por %p209, %p210
      %p212 = scmp.ne.s32.totalorder %s201, %s202
      %p213 = scmp.eq.s32.totalorder %s41, 0
      %p214 = por %p212, %p213
      %p215 = scmp.ne.s32.totalorder %s201, %s202
      %p216 = scmp.eq.s32.totalorder %s42, 1
      %p217 = por %p215, %p216
      %p219 = scmp.ne.s32.totalorder %s202, %s218
      %p220 = scmp.eq.s32.totalorder %s42, 0
      %p221 = por %p219, %p220
      %p222 = scmp.le.s32.totalorder 1, %s36
      %p223 = scmp.lt.s32.totalorder %s36, 3
      %p224 = pnand %p222, %p223
      %p225 = pneg %p224
      // Predicated region
      $region9: #{tpu_custom_call.1} parent=5 // pred_check
        _
      $region10: #{tpu_custom_call.1} parent=5 // pred_check_branch
        %227 = sbr.rel (%p224) target = $region12
      $region11: #{tpu_custom_call.1} parent=5 // pred_region
        %s228 = ssub.s32 %s36, 1
        // Predicated region
        $region13: #{tpu_custom_call.1} parent=11 // pred_check
          %p229 = pneg %p83
        $region14: #{tpu_custom_call.1} parent=11 // pred_check_branch
          %231 = sbr.rel (%p229) target = $region16
        $region15: #{tpu_custom_call.1} parent=11 // pred_region
          %233 = vsyncadd [#allocation13], 0
          %s234 = sshll.u32 %s3, 4
          %s235 = int_to_ptr.hbm [resolvable:$true] %s234
          %s236 = sshll.u32 [#allocation12], 4
          %s237 = int_to_ptr.vmem [resolvable:$true] %s236
          %242 = dma.hbm_to_vmem [thread:$0]  %s235, 512, %s237, [#allocation13], 128, 128, 8
        $region16: #{tpu_custom_call.1} parent=11 // pred_fallthru
          _
        // Predicated region
        $region17: #{tpu_custom_call.1} parent=11 // pred_check
          %p243 = pneg %p104
        $region18: #{tpu_custom_call.1} parent=11 // pred_check_branch
          %245 = sbr.rel (%p243) target = $region20
        $region19: #{tpu_custom_call.1} parent=11 // pred_region
          _
        $region20: #{tpu_custom_call.1} parent=11 // pred_fallthru
          _
        // Predicated region
        $region21: #{tpu_custom_call.1} parent=11 // pred_check
          %p246 = pneg %p125
        $region22: #{tpu_custom_call.1} parent=11 // pred_check_branch
          %248 = sbr.rel (%p246) target = $region24
        $region23: #{tpu_custom_call.1} parent=11 // pred_region
          %250 = vsyncadd [#allocation13], 0
          %s251 = sshll.u32 %s5, 4
          %s252 = int_to_ptr.hbm [resolvable:$true] %s251
          %s253 = sshll.u32 [#allocation14], 4
          %s254 = int_to_ptr.vmem [resolvable:$true] %s253
          %259 = dma.hbm_to_vmem [thread:$0]  %s252, 512, %s254, [#allocation13], 128, 128, 8
        $region24: #{tpu_custom_call.1} parent=11 // pred_fallthru
          _
        // Predicated region
        $region25: #{tpu_custom_call.1} parent=11 // pred_check
          %p260 = pneg %p146
        $region26: #{tpu_custom_call.1} parent=11 // pred_check_branch
          %262 = sbr.rel (%p260) target = $region28
        $region27: #{tpu_custom_call.1} parent=11 // pred_region
          _
        $region28: #{tpu_custom_call.1} parent=11 // pred_fallthru
          _
        // Predicated region
        $region29: #{tpu_custom_call.1} parent=11 // pred_check
          %p263 = pneg %p167
        $region30: #{tpu_custom_call.1} parent=11 // pred_check_branch
          %265 = sbr.rel (%p263) target = $region32
        $region31: #{tpu_custom_call.1} parent=11 // pred_region
          %267 = vsyncadd [#allocation16], 0
          %s268 = sshll.u32 %s7, 4
          %s269 = int_to_ptr.hbm [resolvable:$true] %s268
          %s270 = sshll.u32 [#allocation15], 4
          %s271 = int_to_ptr.vmem [resolvable:$true] %s270
          %276 = dma.hbm_to_vmem [thread:$0]  %s269, 512, %s271, [#allocation16], 128, 128, 8
        $region32: #{tpu_custom_call.1} parent=11 // pred_fallthru
          _
        // Predicated region
        $region33: #{tpu_custom_call.1} parent=11 // pred_check
          %p277 = pneg %p188
        $region34: #{tpu_custom_call.1} parent=11 // pred_check_branch
          %279 = sbr.rel (%p277) target = $region36
        $region35: #{tpu_custom_call.1} parent=11 // pred_region
          %281 = vsyncadd [#allocation16], 0
          %s282 = sshll.u32 %s8, 4
          %s283 = int_to_ptr.hbm [resolvable:$true] %s282
          %s284 = sshll.u32 [#allocation17], 4
          %s285 = int_to_ptr.vmem [resolvable:$true] %s284
          %290 = dma.hbm_to_vmem [thread:$0]  %s283, 512, %s285, [#allocation16], 128, 128, 8
        $region36: #{tpu_custom_call.1} parent=11 // pred_fallthru
          _
      $region12: #{tpu_custom_call.1} parent=5 // pred_fallthru
        _
      %p291 = scmp.lt.s32.totalorder %s36, 2
      // Predicated region
      $region37: #{tpu_custom_call.1} parent=5 // pred_check
        %p292 = pneg %p291
      $region38: #{tpu_custom_call.1} parent=5 // pred_check_branch
        %294 = sbr.rel (%p292) target = $region40
      $region39: #{tpu_custom_call.1} parent=5 // pred_region
        // Predicated region
        $region41: #{tpu_custom_call.1} parent=39 // pred_check
          %p295 = pneg %p56
        $region42: #{tpu_custom_call.1} parent=39 // pred_check_branch
          %297 = sbr.rel (%p295) target = $region44
        $region43: #{tpu_custom_call.1} parent=39 // pred_region
          %s298 = sand.u32 %s46, 1
          %s299 = scalar_lea.sflag [#allocation10], %s298
          %s300 = sand.u32 %s46, 1
          %s301 = smul.addr %s300, 8
          %s302 = scalar_lea.vmem [#allocation9], %s301
          %304 = vsyncadd %s299, 0
          %s305 = smul.addr %s36, 8
          %s306 = scalar_lea.hbm %s2, %s305
          %s308 = sshll.u32 %s306, 4
          %s309 = int_to_ptr.hbm [resolvable:$true] %s308
          %s310 = sshll.u32 %s302, 4
          %s311 = int_to_ptr.vmem [resolvable:$true] %s310
          %313 = dma.hbm_to_vmem [thread:$0]  %s309, 128, %s311, %s299
        $region44: #{tpu_custom_call.1} parent=39 // pred_fallthru
          _
      $region40: #{tpu_custom_call.1} parent=5 // pred_fallthru
        _
      %p314 = scmp.le.s32.totalorder 1, %s36
      %p315 = scmp.lt.s32.totalorder %s36, 3
      %p316 = pnand %p314, %p315
      %p317 = pneg %p316
      // Predicated region
      $region45: #{tpu_custom_call.1} parent=5 // pred_check
        _
      $region46: #{tpu_custom_call.1} parent=5 // pred_check_branch
        %319 = sbr.rel (%p316) target = $region48
      $region47: #{tpu_custom_call.1} parent=5 // pred_region
        %s320 = ssub.s32 %s36, 1
        %s321 = sand.u32 %s49, 1
        %s322 = scalar_lea.sflag [#allocation10], %s321
        %s323 = sand.u32 %s49, 1
        %s324 = smul.addr %s323, 8
        %s325 = scalar_lea.vmem [#allocation9], %s324
        // Predicated region
        $region49: #{tpu_custom_call.1} parent=47 // pred_check
          %p326 = pneg %p62
        $region50: #{tpu_custom_call.1} parent=47 // pred_check_branch
          %328 = sbr.rel (%p326) target = $region52
        $region51: #{tpu_custom_call.1} parent=47 // pred_region
          %330 = dma.done %s322, 128
        $region52: #{tpu_custom_call.1} parent=47 // pred_fallthru
          _
        // Predicated region
        $region53: #{tpu_custom_call.1} parent=47 // pred_check
          %p331 = pneg %p83
        $region54: #{tpu_custom_call.1} parent=47 // pred_check_branch
          %333 = sbr.rel (%p331) target = $region56
        $region55: #{tpu_custom_call.1} parent=47 // pred_region
          %335 = dma.done [#allocation13], 512
        $region56: #{tpu_custom_call.1} parent=47 // pred_fallthru
          _
        // Predicated region
        $region57: #{tpu_custom_call.1} parent=47 // pred_check
          %p336 = pneg %p125
        $region58: #{tpu_custom_call.1} parent=47 // pred_check_branch
          %338 = sbr.rel (%p336) target = $region60
        $region59: #{tpu_custom_call.1} parent=47 // pred_region
          %340 = dma.done [#allocation13], 512
        $region60: #{tpu_custom_call.1} parent=47 // pred_fallthru
          _
        // Predicated region
        $region61: #{tpu_custom_call.1} parent=47 // pred_check
          %p341 = pneg %p167
        $region62: #{tpu_custom_call.1} parent=47 // pred_check_branch
          %343 = sbr.rel (%p341) target = $region64
        $region63: #{tpu_custom_call.1} parent=47 // pred_region
          %345 = dma.done [#allocation16], 512
        $region64: #{tpu_custom_call.1} parent=47 // pred_fallthru
          _
        // Predicated region
        $region65: #{tpu_custom_call.1} parent=47 // pred_check
          %p346 = pneg %p188
        $region66: #{tpu_custom_call.1} parent=47 // pred_check_branch
          %348 = sbr.rel (%p346) target = $region68
        $region67: #{tpu_custom_call.1} parent=47 // pred_region
          %350 = dma.done [#allocation16], 512
        $region68: #{tpu_custom_call.1} parent=47 // pred_fallthru
          _
        %s351 = sand.u32 %s49, 1
        %s352 = scalar_lea.sflag [#allocation10], %s351
        %s353 = sand.u32 %s49, 1
        %s354 = smul.addr %s353, 8
        %s355 = scalar_lea.vmem [#allocation9], %s354
        %p356 = pneg %p62
        %p357 = pneg %p59
        %p358 = pneg %p83
        %p359 = pneg %p80
        %p360 = pneg %p104
        %p361 = pneg %p101
        %p362 = pneg %p125
        %p363 = pneg %p122
        %p364 = pneg %p146
        %p365 = pneg %p143
        %p366 = pneg %p167
        %p367 = pneg %p164
        %p368 = pneg %p188
        %p369 = pneg %p185
        %p370 = pneg %p214
        %p371 = pneg %p211
        %s372 = sand.u32 %s201, 1
        %s373 = scalar_lea.sflag [#allocation11], %s372
        %s374 = sand.u32 %s201, 1
        %s375 = smul.addr %s374, 8
        %s376 = scalar_lea.vmem [#allocation18], %s375
        %s377 = smul.u32 %s41, 8
        %v378 = vld [vmem:[%s325] sm:$0xff]
        %v379 = vld [vmem:[#allocation12] sm:$0xff]
        %v380 = vld [vmem:[#allocation12 + $0x8] sm:$0xff]
        %v381 = vld [vmem:[#allocation12 + $0x10] sm:$0xff]
        %v382 = vld [vmem:[#allocation12 + $0x18] sm:$0xff]
        %v383 = vld [vmem:[%s4] sm:$0x1]
        %v385 = vperm.slane %v383, 0
        %vm387 = vcmask 261120
        %v389 = vsel %vm387, %v378, 0
        %391 = vmatpush.msra.mxu0 0.0
        %392 = vmatpush.msra.mxu0 0.0
        %393 = vmatpush.msra.mxu0 0.0
        %394 = vmatpush.msra.mxu0 0.0
        %395 = vmatpush.msra.mxu0 0.0
        %396 = vmatpush.msra.mxu0 0.0
        %397 = vmatpush.msra.mxu0 0.0
        %398 = vmatpush.msra.mxu0 0.0
        %399 = vmatpush.msra.mxu0 0.0
        %400 = vmatpush.msra.mxu0 0.0
        %401 = vmatpush.msra.mxu0 0.0
        %402 = vmatpush.msra.mxu0 0.0
        %403 = vmatpush.msra.mxu0 %v382
        %404 = vmatpush.msra.mxu0 %v381
        %405 = vmatpush.msra.mxu0 %v380
        %406 = vmatpush.msra.mxu0 %v379
        %407 = vmatmul.f32.gmra.mxu0 %v389
        %v408 = vpop.f32.mrf.mxu0
        %v409 = vadd.f32 %v385, %v408
        %410 = vdwg.mxu0
        %vm411 = vcmask 785408
        %412 = vst.msk [vmem:[#allocation2] sm:$0xff] %vm411, %v409
        %v413 = vld [vmem:[%s325] sm:$0xff]
        %v414 = vld [vmem:[#allocation14] sm:$0xff]
        %v415 = vld [vmem:[#allocation14 + $0x8] sm:$0xff]
        %v416 = vld [vmem:[#allocation14 + $0x10] sm:$0xff]
        %v417 = vld [vmem:[#allocation14 + $0x18] sm:$0xff]
        %v418 = vld [vmem:[%s6] sm:$0x1]
        %v420 = vperm.slane %v418, 0
        %v423 = vsel %vm387, %v413, 0
        %425 = vmatpush.msra.mxu0 0.0
        %426 = vmatpush.msra.mxu0 0.0
        %427 = vmatpush.msra.mxu0 0.0
        %428 = vmatpush.msra.mxu0 0.0
        %429 = vmatpush.msra.mxu0 0.0
        %430 = vmatpush.msra.mxu0 0.0
        %431 = vmatpush.msra.mxu0 0.0
        %432 = vmatpush.msra.mxu0 0.0
        %433 = vmatpush.msra.mxu0 0.0
        %434 = vmatpush.msra.mxu0 0.0
        %435 = vmatpush.msra.mxu0 0.0
        %436 = vmatpush.msra.mxu0 0.0
        %437 = vmatpush.msra.mxu0 %v417
        %438 = vmatpush.msra.mxu0 %v416
        %439 = vmatpush.msra.mxu0 %v415
        %440 = vmatpush.msra.mxu0 %v414
        %441 = vmatmul.f32.gmra.mxu0 %v423
        %v442 = vpop.f32.mrf.mxu0
        %v443 = vadd.f32 %v420, %v442
        %444 = vdwg.mxu0
        %445 = vst.msk [vmem:[#allocation3] sm:$0xff] %vm387, %v443
        %446 = vst.msk [vmem:[#allocation4] sm:$0xff] %vm387, 0.0
        %447 = vst.msk [vmem:[#allocation5] sm:$0xff] %vm387, 0.0
        %v448 = vld [vmem:[#allocation15] sm:$0xff]
        %v449 = vld [vmem:[#allocation15 + $0x8] sm:$0xff]
        %v450 = vld [vmem:[#allocation15 + $0x10] sm:$0xff]
        %v451 = vld [vmem:[#allocation15 + $0x18] sm:$0xff]
        %v452 = vld [vmem:[#allocation17] sm:$0xff]
        %v453 = vld [vmem:[#allocation17 + $0x8] sm:$0xff]
        %v454 = vld [vmem:[#allocation17 + $0x10] sm:$0xff]
        %v455 = vld [vmem:[#allocation17 + $0x18] sm:$0xff]
        %s456 = sld [smem:[#allocation7 + %s377]]
        %s457 = sld [smem:[#allocation8 + %s377]]
        %s458 = scalar_lea.vmem [#allocation4], %s456
        %v459 = vld [vmem:[%s458] sm:$0x1]
        %s460 = scalar_lea.vmem [#allocation5], %s456
        %v461 = vld [vmem:[%s460] sm:$0x1]
        %s462 = scalar_lea.vmem [#allocation2], %s456
        %v463 = vld [vmem:[%s462] sm:$0x1]
        %v465 = vsel %vm387, %v459, 0
        %467 = vmatpush.msra.mxu0 0.0
        %468 = vmatpush.msra.mxu0 0.0
        %469 = vmatpush.msra.mxu0 0.0
        %470 = vmatpush.msra.mxu0 0.0
        %471 = vmatpush.msra.mxu0 0.0
        %472 = vmatpush.msra.mxu0 0.0
        %473 = vmatpush.msra.mxu0 0.0
        %474 = vmatpush.msra.mxu0 0.0
        %475 = vmatpush.msra.mxu0 0.0
        %476 = vmatpush.msra.mxu0 0.0
        %477 = vmatpush.msra.mxu0 0.0
        %478 = vmatpush.msra.mxu0 0.0
        %479 = vmatpush.msra.mxu0 %v451
        %480 = vmatpush.msra.mxu0 %v450
        %481 = vmatpush.msra.mxu0 %v449
        %482 = vmatpush.msra.mxu0 %v448
        %483 = vmatmul.f32.gmra.mxu0 %v465
        %v484 = vpop.f32.mrf.mxu0
        %v485 = vadd.f32 0.0, %v484
        %486 = vdwg.mxu0
        %v487 = vadd.f32 %v463, %v485
        %v488 = vxor.u32 %v487, 2147483648
        %v489 = vmul.f32 %v488, 1.442695
        %v490 = vpow.pop %v489
        %v491 = vadd.f32 %v490, 1.0
        %v492 = vrcp.pop %v491
        %v493 = vmul.f32 %v491, %v492
        %v494 = vsub.f32 1.0, %v493
        %v495 = vmul.f32 %v492, %v494
        %v496 = vadd.f32 %v492, %v495
        %vm497 = vweird.f32 %v491
        %vm498 = vweird.f32 %v492
        %vm499 = vmor %vm497, %vm498
        %v500 = vsel %vm499, %v492, %v496
        %v501 = vand.u32 2147483647, %v491
        %vm502 = vcmp.eq.f32.partialorder %v501, 8.507059e+37
        %v503 = vand.u32 %v491, 2147483648
        %v504 = vor.u32 1.1754944e-38, %v503
        %v505 = vsel %vm502, %v504, %v500
        %v506 = vmul.f32 1.0, %v505
        %v507 = vtanh.pop %v487
        %509 = vrot.lane.b32.xlu0 %v507, 64
        %v510 = vpop.permute.xlu0 %509
        %v512 = vmul.f32 %v506, %v510
        %v513 = vadd.f32 %v512, %v461
        %v514 = vtanh.pop %v513
        %516 = vrot.lane.b32.xlu0 %v514, 32
        %v517 = vpop.permute.xlu0 %516
        %v519 = vmul.f32 %v506, %v517
        %521 = vrot.lane.b32.xlu0 %v519, 96
        %v522 = vpop.permute.xlu0 %521
        %s524 = scalar_lea.vmem %s376, %s456 [#allocation18]
        %vm525 = vcmask 253952
        %526 = vst.msk [vmem:[%s524] sm:$0x1] %vm525, %v522
        %s527 = scalar_lea.vmem [#allocation3], %s457
        %v528 = vld [vmem:[%s527] sm:$0x1]
        %v529 = vsel %vm387, %v522, 0
        %531 = vmatpush.msra.mxu0 0.0
        %532 = vmatpush.msra.mxu0 0.0
        %533 = vmatpush.msra.mxu0 0.0
        %534 = vmatpush.msra.mxu0 0.0
        %535 = vmatpush.msra.mxu0 0.0
        %536 = vmatpush.msra.mxu0 0.0
        %537 = vmatpush.msra.mxu0 0.0
        %538 = vmatpush.msra.mxu0 0.0
        %539 = vmatpush.msra.mxu0 0.0
        %540 = vmatpush.msra.mxu0 0.0
        %541 = vmatpush.msra.mxu0 0.0
        %542 = vmatpush.msra.mxu0 0.0
        %543 = vmatpush.msra.mxu0 %v455
        %544 = vmatpush.msra.mxu0 %v454
        %545 = vmatpush.msra.mxu0 %v453
        %546 = vmatpush.msra.mxu0 %v452
        %547 = vmatmul.f32.gmra.mxu0 %v529
        %v548 = vpop.f32.mrf.mxu0
        %v549 = vadd.f32 0.0, %v548
        %550 = vdwg.mxu0
        %v551 = vadd.f32 %v528, %v549
        %v552 = vxor.u32 %v551, 2147483648
        %v553 = vmul.f32 %v552, 1.442695
        %v554 = vpow.pop %v553
        %v555 = vadd.f32 %v554, 1.0
        %v556 = vrcp.pop %v555
        %v557 = vmul.f32 %v555, %v556
        %v558 = vsub.f32 1.0, %v557
        %v559 = vmul.f32 %v556, %v558
        %v560 = vadd.f32 %v556, %v559
        %vm561 = vweird.f32 %v555
        %vm562 = vweird.f32 %v556
        %vm563 = vmor %vm561, %vm562
        %v564 = vsel %vm563, %v556, %v560
        %v565 = vand.u32 2147483647, %v555
        %vm566 = vcmp.eq.f32.partialorder %v565, 8.507059e+37
        %v567 = vand.u32 %v555, 2147483648
        %v568 = vor.u32 1.1754944e-38, %v567
        %v569 = vsel %vm566, %v568, %v564
        %v570 = vmul.f32 1.0, %v569
        %s571 = scalar_lea.vmem [#allocation4], %s457
        %v572 = vld [vmem:[%s571] sm:$0x1]
        %v573 = vadd.f32 %v572, %v522
        %574 = vst.msk [vmem:[%s571] sm:$0x1] %vm525, %v573
        %s575 = scalar_lea.vmem [#allocation5], %s457
        %v576 = vld [vmem:[%s575] sm:$0x1]
        %v577 = vmul.f32 %v570, %v513
        %v578 = vadd.f32 %v576, %v577
        %579 = vst.msk [vmem:[%s575] sm:$0x1] %vm525, %v578
        %s580 = sadd.s32 %s377, 1
        %s581 = sld [smem:[#allocation7 + %s580]]
        %s582 = sld [smem:[#allocation8 + %s580]]
        %s583 = scalar_lea.vmem [#allocation4], %s581
        %v584 = vld [vmem:[%s583] sm:$0x1]
        %s585 = scalar_lea.vmem [#allocation5], %s581
        %v586 = vld [vmem:[%s585] sm:$0x1]
        %s587 = scalar_lea.vmem [#allocation2], %s581
        %v588 = vld [vmem:[%s587] sm:$0x1]
        %v590 = vsel %vm387, %v584, 0
        %592 = vmatpush.msra.mxu0 0.0
        %593 = vmatpush.msra.mxu0 0.0
        %594 = vmatpush.msra.mxu0 0.0
        %595 = vmatpush.msra.mxu0 0.0
        %596 = vmatpush.msra.mxu0 0.0
        %597 = vmatpush.msra.mxu0 0.0
        %598 = vmatpush.msra.mxu0 0.0
        %599 = vmatpush.msra.mxu0 0.0
        %600 = vmatpush.msra.mxu0 0.0
        %601 = vmatpush.msra.mxu0 0.0
        %602 = vmatpush.msra.mxu0 0.0
        %603 = vmatpush.msra.mxu0 0.0
        %604 = vmatpush.msra.mxu0 %v451
        %605 = vmatpush.msra.mxu0 %v450
        %606 = vmatpush.msra.mxu0 %v449
        %607 = vmatpush.msra.mxu0 %v448
        %608 = vmatmul.f32.gmra.mxu0 %v590
        %v609 = vpop.f32.mrf.mxu0
        %v610 = vadd.f32 0.0, %v609
        %611 = vdwg.mxu0
        %v612 = vadd.f32 %v588, %v610
        %v613 = vxor.u32 %v612, 2147483648
        %v614 = vmul.f32 %v613, 1.442695
        %v615 = vpow.pop %v614
        %v616 = vadd.f32 %v615, 1.0
        %v617 = vrcp.pop %v616
        %v618 = vmul.f32 %v616, %v617
        %v619 = vsub.f32 1.0, %v618
        %v620 = vmul.f32 %v617, %v619
        %v621 = vadd.f32 %v617, %v620
        %vm622 = vweird.f32 %v616
        %vm623 = vweird.f32 %v617
        %vm624 = vmor %vm622, %vm623
        %v625 = vsel %vm624, %v617, %v621
        %v626 = vand.u32 2147483647, %v616
        %vm627 = vcmp.eq.f32.partialorder %v626, 8.507059e+37
        %v628 = vand.u32 %v616, 2147483648
        %v629 = vor.u32 1.1754944e-38, %v628
        %v630 = vsel %vm627, %v629, %v625
        %v631 = vmul.f32 1.0, %v630
        %v632 = vtanh.pop %v612
        %634 = vrot.lane.b32.xlu0 %v632, 64
        %v635 = vpop.permute.xlu0 %634
        %v637 = vmul.f32 %v631, %v635
        %v638 = vadd.f32 %v637, %v586
        %v639 = vtanh.pop %v638
        %641 = vrot.lane.b32.xlu0 %v639, 32
        %v642 = vpop.permute.xlu0 %641
        %v644 = vmul.f32 %v631, %v642
        %646 = vrot.lane.b32.xlu0 %v644, 96
        %v647 = vpop.permute.xlu0 %646
        %s649 = scalar_lea.vmem %s376, %s581 [#allocation18]
        %650 = vst.msk [vmem:[%s649] sm:$0x1] %vm525, %v647
        %s651 = scalar_lea.vmem [#allocation3], %s582
        %v652 = vld [vmem:[%s651] sm:$0x1]
        %v653 = vsel %vm387, %v647, 0
        %655 = vmatpush.msra.mxu0 0.0
        %656 = vmatpush.msra.mxu0 0.0
        %657 = vmatpush.msra.mxu0 0.0
        %658 = vmatpush.msra.mxu0 0.0
        %659 = vmatpush.msra.mxu0 0.0
        %660 = vmatpush.msra.mxu0 0.0
        %661 = vmatpush.msra.mxu0 0.0
        %662 = vmatpush.msra.mxu0 0.0
        %663 = vmatpush.msra.mxu0 0.0
        %664 = vmatpush.msra.mxu0 0.0
        %665 = vmatpush.msra.mxu0 0.0
        %666 = vmatpush.msra.mxu0 0.0
        %667 = vmatpush.msra.mxu0 %v455
        %668 = vmatpush.msra.mxu0 %v454
        %669 = vmatpush.msra.mxu0 %v453
        %670 = vmatpush.msra.mxu0 %v452
        %671 = vmatmul.f32.gmra.mxu0 %v653
        %v672 = vpop.f32.mrf.mxu0
        %v673 = vadd.f32 0.0, %v672
        %674 = vdwg.mxu0
        %v675 = vadd.f32 %v652, %v673
        %v676 = vxor.u32 %v675, 2147483648
        %v677 = vmul.f32 %v676, 1.442695
        %v678 = vpow.pop %v677
        %v679 = vadd.f32 %v678, 1.0
        %v680 = vrcp.pop %v679
        %v681 = vmul.f32 %v679, %v680
        %v682 = vsub.f32 1.0, %v681
        %v683 = vmul.f32 %v680, %v682
        %v684 = vadd.f32 %v680, %v683
        %vm685 = vweird.f32 %v679
        %vm686 = vweird.f32 %v680
        %vm687 = vmor %vm685, %vm686
        %v688 = vsel %vm687, %v680, %v684
        %v689 = vand.u32 2147483647, %v679
        %vm690 = vcmp.eq.f32.partialorder %v689, 8.507059e+37
        %v691 = vand.u32 %v679, 2147483648
        %v692 = vor.u32 1.1754944e-38, %v691
        %v693 = vsel %vm690, %v692, %v688
        %v694 = vmul.f32 1.0, %v693
        %s695 = scalar_lea.vmem [#allocation4], %s582
        %v696 = vld [vmem:[%s695] sm:$0x1]
        %v697 = vadd.f32 %v696, %v647
        %698 = vst.msk [vmem:[%s695] sm:$0x1] %vm525, %v697
        %s699 = scalar_lea.vmem [#allocation5], %s582
        %v700 = vld [vmem:[%s699] sm:$0x1]
        %v701 = vmul.f32 %v694, %v638
        %v702 = vadd.f32 %v700, %v701
        %703 = vst.msk [vmem:[%s699] sm:$0x1] %vm525, %v702
        %s704 = sadd.s32 %s377, 2
        %s705 = sld [smem:[#allocation7 + %s704]]
        %s706 = sld [smem:[#allocation8 + %s704]]
        %s707 = scalar_lea.vmem [#allocation4], %s705
        %v708 = vld [vmem:[%s707] sm:$0x1]
        %s709 = scalar_lea.vmem [#allocation5], %s705
        %v710 = vld [vmem:[%s709] sm:$0x1]
        %s711 = scalar_lea.vmem [#allocation2], %s705
        %v712 = vld [vmem:[%s711] sm:$0x1]
        %v714 = vsel %vm387, %v708, 0
        %716 = vmatpush.msra.mxu0 0.0
        %717 = vmatpush.msra.mxu0 0.0
        %718 = vmatpush.msra.mxu0 0.0
        %719 = vmatpush.msra.mxu0 0.0
        %720 = vmatpush.msra.mxu0 0.0
        %721 = vmatpush.msra.mxu0 0.0
        %722 = vmatpush.msra.mxu0 0.0
        %723 = vmatpush.msra.mxu0 0.0
        %724 = vmatpush.msra.mxu0 0.0
        %725 = vmatpush.msra.mxu0 0.0
        %726 = vmatpush.msra.mxu0 0.0
        %727 = vmatpush.msra.mxu0 0.0
        %728 = vmatpush.msra.mxu0 %v451
        %729 = vmatpush.msra.mxu0 %v450
        %730 = vmatpush.msra.mxu0 %v449
        %731 = vmatpush.msra.mxu0 %v448
        %732 = vmatmul.f32.gmra.mxu0 %v714
        %v733 = vpop.f32.mrf.mxu0
        %v734 = vadd.f32 0.0, %v733
        %735 = vdwg.mxu0
        %v736 = vadd.f32 %v712, %v734
        %v737 = vxor.u32 %v736, 2147483648
        %v738 = vmul.f32 %v737, 1.442695
        %v739 = vpow.pop %v738
        %v740 = vadd.f32 %v739, 1.0
        %v741 = vrcp.pop %v740
        %v742 = vmul.f32 %v740, %v741
        %v743 = vsub.f32 1.0, %v742
        %v744 = vmul.f32 %v741, %v743
        %v745 = vadd.f32 %v741, %v744
        %vm746 = vweird.f32 %v740
        %vm747 = vweird.f32 %v741
        %vm748 = vmor %vm746, %vm747
        %v749 = vsel %vm748, %v741, %v745
        %v750 = vand.u32 2147483647, %v740
        %vm751 = vcmp.eq.f32.partialorder %v750, 8.507059e+37
        %v752 = vand.u32 %v740, 2147483648
        %v753 = vor.u32 1.1754944e-38, %v752
        %v754 = vsel %vm751, %v753, %v749
        %v755 = vmul.f32 1.0, %v754
        %v756 = vtanh.pop %v736
        %758 = vrot.lane.b32.xlu0 %v756, 64
        %v759 = vpop.permute.xlu0 %758
        %v761 = vmul.f32 %v755, %v759
        %v762 = vadd.f32 %v761, %v710
        %v763 = vtanh.pop %v762
        %765 = vrot.lane.b32.xlu0 %v763, 32
        %v766 = vpop.permute.xlu0 %765
        %v768 = vmul.f32 %v755, %v766
        %770 = vrot.lane.b32.xlu0 %v768, 96
        %v771 = vpop.permute.xlu0 %770
        %s773 = scalar_lea.vmem %s376, %s705 [#allocation18]
        %774 = vst.msk [vmem:[%s773] sm:$0x1] %vm525, %v771
        %s775 = scalar_lea.vmem [#allocation3], %s706
        %v776 = vld [vmem:[%s775] sm:$0x1]
        %v777 = vsel %vm387, %v771, 0
        %779 = vmatpush.msra.mxu0 0.0
        %780 = vmatpush.msra.mxu0 0.0
        %781 = vmatpush.msra.mxu0 0.0
        %782 = vmatpush.msra.mxu0 0.0
        %783 = vmatpush.msra.mxu0 0.0
        %784 = vmatpush.msra.mxu0 0.0
        %785 = vmatpush.msra.mxu0 0.0
        %786 = vmatpush.msra.mxu0 0.0
        %787 = vmatpush.msra.mxu0 0.0
        %788 = vmatpush.msra.mxu0 0.0
        %789 = vmatpush.msra.mxu0 0.0
        %790 = vmatpush.msra.mxu0 0.0
        %791 = vmatpush.msra.mxu0 %v455
        %792 = vmatpush.msra.mxu0 %v454
        %793 = vmatpush.msra.mxu0 %v453
        %794 = vmatpush.msra.mxu0 %v452
        %795 = vmatmul.f32.gmra.mxu0 %v777
        %v796 = vpop.f32.mrf.mxu0
        %v797 = vadd.f32 0.0, %v796
        %798 = vdwg.mxu0
        %v799 = vadd.f32 %v776, %v797
        %v800 = vxor.u32 %v799, 2147483648
        %v801 = vmul.f32 %v800, 1.442695
        %v802 = vpow.pop %v801
        %v803 = vadd.f32 %v802, 1.0
        %v804 = vrcp.pop %v803
        %v805 = vmul.f32 %v803, %v804
        %v806 = vsub.f32 1.0, %v805
        %v807 = vmul.f32 %v804, %v806
        %v808 = vadd.f32 %v804, %v807
        %vm809 = vweird.f32 %v803
        %vm810 = vweird.f32 %v804
        %vm811 = vmor %vm809, %vm810
        %v812 = vsel %vm811, %v804, %v808
        %v813 = vand.u32 2147483647, %v803
        %vm814 = vcmp.eq.f32.partialorder %v813, 8.507059e+37
        %v815 = vand.u32 %v803, 2147483648
        %v816 = vor.u32 1.1754944e-38, %v815
        %v817 = vsel %vm814, %v816, %v812
        %v818 = vmul.f32 1.0, %v817
        %s819 = scalar_lea.vmem [#allocation4], %s706
        %v820 = vld [vmem:[%s819] sm:$0x1]
        %v821 = vadd.f32 %v820, %v771
        %822 = vst.msk [vmem:[%s819] sm:$0x1] %vm525, %v821
        %s823 = scalar_lea.vmem [#allocation5], %s706
        %v824 = vld [vmem:[%s823] sm:$0x1]
        %v825 = vmul.f32 %v818, %v762
        %v826 = vadd.f32 %v824, %v825
        %827 = vst.msk [vmem:[%s823] sm:$0x1] %vm525, %v826
        %s828 = sadd.s32 %s377, 3
        %s829 = sld [smem:[#allocation7 + %s828]]
        %s830 = sld [smem:[#allocation8 + %s828]]
        %s831 = scalar_lea.vmem [#allocation4], %s829
        %v832 = vld [vmem:[%s831] sm:$0x1]
        %s833 = scalar_lea.vmem [#allocation5], %s829
        %v834 = vld [vmem:[%s833] sm:$0x1]
        %s835 = scalar_lea.vmem [#allocation2], %s829
        %v836 = vld [vmem:[%s835] sm:$0x1]
        %v838 = vsel %vm387, %v832, 0
        %840 = vmatpush.msra.mxu0 0.0
        %841 = vmatpush.msra.mxu0 0.0
        %842 = vmatpush.msra.mxu0 0.0
        %843 = vmatpush.msra.mxu0 0.0
        %844 = vmatpush.msra.mxu0 0.0
        %845 = vmatpush.msra.mxu0 0.0
        %846 = vmatpush.msra.mxu0 0.0
        %847 = vmatpush.msra.mxu0 0.0
        %848 = vmatpush.msra.mxu0 0.0
        %849 = vmatpush.msra.mxu0 0.0
        %850 = vmatpush.msra.mxu0 0.0
        %851 = vmatpush.msra.mxu0 0.0
        %852 = vmatpush.msra.mxu0 %v451
        %853 = vmatpush.msra.mxu0 %v450
        %854 = vmatpush.msra.mxu0 %v449
        %855 = vmatpush.msra.mxu0 %v448
        %856 = vmatmul.f32.gmra.mxu0 %v838
        %v857 = vpop.f32.mrf.mxu0
        %v858 = vadd.f32 0.0, %v857
        %859 = vdwg.mxu0
        %v860 = vadd.f32 %v836, %v858
        %v861 = vxor.u32 %v860, 2147483648
        %v862 = vmul.f32 %v861, 1.442695
        %v863 = vpow.pop %v862
        %v864 = vadd.f32 %v863, 1.0
        %v865 = vrcp.pop %v864
        %v866 = vmul.f32 %v864, %v865
        %v867 = vsub.f32 1.0, %v866
        %v868 = vmul.f32 %v865, %v867
        %v869 = vadd.f32 %v865, %v868
        %vm870 = vweird.f32 %v864
        %vm871 = vweird.f32 %v865
        %vm872 = vmor %vm870, %vm871
        %v873 = vsel %vm872, %v865, %v869
        %v874 = vand.u32 2147483647, %v864
        %vm875 = vcmp.eq.f32.partialorder %v874, 8.507059e+37
        %v876 = vand.u32 %v864, 2147483648
        %v877 = vor.u32 1.1754944e-38, %v876
        %v878 = vsel %vm875, %v877, %v873
        %v879 = vmul.f32 1.0, %v878
        %v880 = vtanh.pop %v860
        %882 = vrot.lane.b32.xlu0 %v880, 64
        %v883 = vpop.permute.xlu0 %882
        %v885 = vmul.f32 %v879, %v883
        %v886 = vadd.f32 %v885, %v834
        %v887 = vtanh.pop %v886
        %889 = vrot.lane.b32.xlu0 %v887, 32
        %v890 = vpop.permute.xlu0 %889
        %v892 = vmul.f32 %v879, %v890
        %894 = vrot.lane.b32.xlu0 %v892, 96
        %v895 = vpop.permute.xlu0 %894
        %s897 = scalar_lea.vmem %s376, %s829 [#allocation18]
        %898 = vst.msk [vmem:[%s897] sm:$0x1] %vm525, %v895
        %s899 = scalar_lea.vmem [#allocation3], %s830
        %v900 = vld [vmem:[%s899] sm:$0x1]
        %v901 = vsel %vm387, %v895, 0
        %903 = vmatpush.msra.mxu0 0.0
        %904 = vmatpush.msra.mxu0 0.0
        %905 = vmatpush.msra.mxu0 0.0
        %906 = vmatpush.msra.mxu0 0.0
        %907 = vmatpush.msra.mxu0 0.0
        %908 = vmatpush.msra.mxu0 0.0
        %909 = vmatpush.msra.mxu0 0.0
        %910 = vmatpush.msra.mxu0 0.0
        %911 = vmatpush.msra.mxu0 0.0
        %912 = vmatpush.msra.mxu0 0.0
        %913 = vmatpush.msra.mxu0 0.0
        %914 = vmatpush.msra.mxu0 0.0
        %915 = vmatpush.msra.mxu0 %v455
        %916 = vmatpush.msra.mxu0 %v454
        %917 = vmatpush.msra.mxu0 %v453
        %918 = vmatpush.msra.mxu0 %v452
        %919 = vmatmul.f32.gmra.mxu0 %v901
        %v920 = vpop.f32.mrf.mxu0
        %v921 = vadd.f32 0.0, %v920
        %922 = vdwg.mxu0
        %v923 = vadd.f32 %v900, %v921
        %v924 = vxor.u32 %v923, 2147483648
        %v925 = vmul.f32 %v924, 1.442695
        %v926 = vpow.pop %v925
        %v927 = vadd.f32 %v926, 1.0
        %v928 = vrcp.pop %v927
        %v929 = vmul.f32 %v927, %v928
        %v930 = vsub.f32 1.0, %v929
        %v931 = vmul.f32 %v928, %v930
        %v932 = vadd.f32 %v928, %v931
        %vm933 = vweird.f32 %v927
        %vm934 = vweird.f32 %v928
        %vm935 = vmor %vm933, %vm934
        %v936 = vsel %vm935, %v928, %v932
        %v937 = vand.u32 2147483647, %v927
        %vm938 = vcmp.eq.f32.partialorder %v937, 8.507059e+37
        %v939 = vand.u32 %v927, 2147483648
        %v940 = vor.u32 1.1754944e-38, %v939
        %v941 = vsel %vm938, %v940, %v936
        %v942 = vmul.f32 1.0, %v941
        %s943 = scalar_lea.vmem [#allocation4], %s830
        %v944 = vld [vmem:[%s943] sm:$0x1]
        %v945 = vadd.f32 %v944, %v895
        %946 = vst.msk [vmem:[%s943] sm:$0x1] %vm525, %v945
        %s947 = scalar_lea.vmem [#allocation5], %s830
        %v948 = vld [vmem:[%s947] sm:$0x1]
        %v949 = vmul.f32 %v942, %v886
        %v950 = vadd.f32 %v948, %v949
        %951 = vst.msk [vmem:[%s947] sm:$0x1] %vm525, %v950
        %s952 = sadd.s32 %s377, 4
        %s953 = sld [smem:[#allocation7 + %s952]]
        %s954 = sld [smem:[#allocation8 + %s952]]
        %s955 = scalar_lea.vmem [#allocation4], %s953
        %v956 = vld [vmem:[%s955] sm:$0x1]
        %s957 = scalar_lea.vmem [#allocation5], %s953
        %v958 = vld [vmem:[%s957] sm:$0x1]
        %s959 = scalar_lea.vmem [#allocation2], %s953
        %v960 = vld [vmem:[%s959] sm:$0x1]
        %v962 = vsel %vm387, %v956, 0
        %964 = vmatpush.msra.mxu0 0.0
        %965 = vmatpush.msra.mxu0 0.0
        %966 = vmatpush.msra.mxu0 0.0
        %967 = vmatpush.msra.mxu0 0.0
        %968 = vmatpush.msra.mxu0 0.0
        %969 = vmatpush.msra.mxu0 0.0
        %970 = vmatpush.msra.mxu0 0.0
        %971 = vmatpush.msra.mxu0 0.0
        %972 = vmatpush.msra.mxu0 0.0
        %973 = vmatpush.msra.mxu0 0.0
        %974 = vmatpush.msra.mxu0 0.0
        %975 = vmatpush.msra.mxu0 0.0
        %976 = vmatpush.msra.mxu0 %v451
        %977 = vmatpush.msra.mxu0 %v450
        %978 = vmatpush.msra.mxu0 %v449
        %979 = vmatpush.msra.mxu0 %v448
        %980 = vmatmul.f32.gmra.mxu0 %v962
        %v981 = vpop.f32.mrf.mxu0
        %v982 = vadd.f32 0.0, %v981
        %983 = vdwg.mxu0
        %v984 = vadd.f32 %v960, %v982
        %v985 = vxor.u32 %v984, 2147483648
        %v986 = vmul.f32 %v985, 1.442695
        %v987 = vpow.pop %v986
        %v988 = vadd.f32 %v987, 1.0
        %v989 = vrcp.pop %v988
        %v990 = vmul.f32 %v988, %v989
        %v991 = vsub.f32 1.0, %v990
        %v992 = vmul.f32 %v989, %v991
        %v993 = vadd.f32 %v989, %v992
        %vm994 = vweird.f32 %v988
        %vm995 = vweird.f32 %v989
        %vm996 = vmor %vm994, %vm995
        %v997 = vsel %vm996, %v989, %v993
        %v998 = vand.u32 2147483647, %v988
        %vm999 = vcmp.eq.f32.partialorder %v998, 8.507059e+37
        %v1000 = vand.u32 %v988, 2147483648
        %v1001 = vor.u32 1.1754944e-38, %v1000
        %v1002 = vsel %vm999, %v1001, %v997
        %v1003 = vmul.f32 1.0, %v1002
        %v1004 = vtanh.pop %v984
        %1006 = vrot.lane.b32.xlu0 %v1004, 64
        %v1007 = vpop.permute.xlu0 %1006
        %v1009 = vmul.f32 %v1003, %v1007
        %v1010 = vadd.f32 %v1009, %v958
        %v1011 = vtanh.pop %v1010
        %1013 = vrot.lane.b32.xlu0 %v1011, 32
        %v1014 = vpop.permute.xlu0 %1013
        %v1016 = vmul.f32 %v1003, %v1014
        %1018 = vrot.lane.b32.xlu0 %v1016, 96
        %v1019 = vpop.permute.xlu0 %1018
        %s1021 = scalar_lea.vmem %s376, %s953 [#allocation18]
        %1022 = vst.msk [vmem:[%s1021] sm:$0x1] %vm525, %v1019
        %s1023 = scalar_lea.vmem [#allocation3], %s954
        %v1024 = vld [vmem:[%s1023] sm:$0x1]
        %v1025 = vsel %vm387, %v1019, 0
        %1027 = vmatpush.msra.mxu0 0.0
        %1028 = vmatpush.msra.mxu0 0.0
        %1029 = vmatpush.msra.mxu0 0.0
        %1030 = vmatpush.msra.mxu0 0.0
        %1031 = vmatpush.msra.mxu0 0.0
        %1032 = vmatpush.msra.mxu0 0.0
        %1033 = vmatpush.msra.mxu0 0.0
        %1034 = vmatpush.msra.mxu0 0.0
        %1035 = vmatpush.msra.mxu0 0.0
        %1036 = vmatpush.msra.mxu0 0.0
        %1037 = vmatpush.msra.mxu0 0.0
        %1038 = vmatpush.msra.mxu0 0.0
        %1039 = vmatpush.msra.mxu0 %v455
        %1040 = vmatpush.msra.mxu0 %v454
        %1041 = vmatpush.msra.mxu0 %v453
        %1042 = vmatpush.msra.mxu0 %v452
        %1043 = vmatmul.f32.gmra.mxu0 %v1025
        %v1044 = vpop.f32.mrf.mxu0
        %v1045 = vadd.f32 0.0, %v1044
        %1046 = vdwg.mxu0
        %v1047 = vadd.f32 %v1024, %v1045
        %v1048 = vxor.u32 %v1047, 2147483648
        %v1049 = vmul.f32 %v1048, 1.442695
        %v1050 = vpow.pop %v1049
        %v1051 = vadd.f32 %v1050, 1.0
        %v1052 = vrcp.pop %v1051
        %v1053 = vmul.f32 %v1051, %v1052
        %v1054 = vsub.f32 1.0, %v1053
        %v1055 = vmul.f32 %v1052, %v1054
        %v1056 = vadd.f32 %v1052, %v1055
        %vm1057 = vweird.f32 %v1051
        %vm1058 = vweird.f32 %v1052
        %vm1059 = vmor %vm1057, %vm1058
        %v1060 = vsel %vm1059, %v1052, %v1056
        %v1061 = vand.u32 2147483647, %v1051
        %vm1062 = vcmp.eq.f32.partialorder %v1061, 8.507059e+37
        %v1063 = vand.u32 %v1051, 2147483648
        %v1064 = vor.u32 1.1754944e-38, %v1063
        %v1065 = vsel %vm1062, %v1064, %v1060
        %v1066 = vmul.f32 1.0, %v1065
        %s1067 = scalar_lea.vmem [#allocation4], %s954
        %v1068 = vld [vmem:[%s1067] sm:$0x1]
        %v1069 = vadd.f32 %v1068, %v1019
        %1070 = vst.msk [vmem:[%s1067] sm:$0x1] %vm525, %v1069
        %s1071 = scalar_lea.vmem [#allocation5], %s954
        %v1072 = vld [vmem:[%s1071] sm:$0x1]
        %v1073 = vmul.f32 %v1066, %v1010
        %v1074 = vadd.f32 %v1072, %v1073
        %1075 = vst.msk [vmem:[%s1071] sm:$0x1] %vm525, %v1074
        %s1076 = sadd.s32 %s377, 5
        %s1077 = sld [smem:[#allocation7 + %s1076]]
        %s1078 = sld [smem:[#allocation8 + %s1076]]
        %s1079 = scalar_lea.vmem [#allocation4], %s1077
        %v1080 = vld [vmem:[%s1079] sm:$0x1]
        %s1081 = scalar_lea.vmem [#allocation5], %s1077
        %v1082 = vld [vmem:[%s1081] sm:$0x1]
        %s1083 = scalar_lea.vmem [#allocation2], %s1077
        %v1084 = vld [vmem:[%s1083] sm:$0x1]
        %v1086 = vsel %vm387, %v1080, 0
        %1088 = vmatpush.msra.mxu0 0.0
        %1089 = vmatpush.msra.mxu0 0.0
        %1090 = vmatpush.msra.mxu0 0.0
        %1091 = vmatpush.msra.mxu0 0.0
        %1092 = vmatpush.msra.mxu0 0.0
        %1093 = vmatpush.msra.mxu0 0.0
        %1094 = vmatpush.msra.mxu0 0.0
        %1095 = vmatpush.msra.mxu0 0.0
        %1096 = vmatpush.msra.mxu0 0.0
        %1097 = vmatpush.msra.mxu0 0.0
        %1098 = vmatpush.msra.mxu0 0.0
        %1099 = vmatpush.msra.mxu0 0.0
        %1100 = vmatpush.msra.mxu0 %v451
        %1101 = vmatpush.msra.mxu0 %v450
        %1102 = vmatpush.msra.mxu0 %v449
        %1103 = vmatpush.msra.mxu0 %v448
        %1104 = vmatmul.f32.gmra.mxu0 %v1086
        %v1105 = vpop.f32.mrf.mxu0
        %v1106 = vadd.f32 0.0, %v1105
        %1107 = vdwg.mxu0
        %v1108 = vadd.f32 %v1084, %v1106
        %v1109 = vxor.u32 %v1108, 2147483648
        %v1110 = vmul.f32 %v1109, 1.442695
        %v1111 = vpow.pop %v1110
        %v1112 = vadd.f32 %v1111, 1.0
        %v1113 = vrcp.pop %v1112
        %v1114 = vmul.f32 %v1112, %v1113
        %v1115 = vsub.f32 1.0, %v1114
        %v1116 = vmul.f32 %v1113, %v1115
        %v1117 = vadd.f32 %v1113, %v1116
        %vm1118 = vweird.f32 %v1112
        %vm1119 = vweird.f32 %v1113
        %vm1120 = vmor %vm1118, %vm1119
        %v1121 = vsel %vm1120, %v1113, %v1117
        %v1122 = vand.u32 2147483647, %v1112
        %vm1123 = vcmp.eq.f32.partialorder %v1122, 8.507059e+37
        %v1124 = vand.u32 %v1112, 2147483648
        %v1125 = vor.u32 1.1754944e-38, %v1124
        %v1126 = vsel %vm1123, %v1125, %v1121
        %v1127 = vmul.f32 1.0, %v1126
        %v1128 = vtanh.pop %v1108
        %1130 = vrot.lane.b32.xlu0 %v1128, 64
        %v1131 = vpop.permute.xlu0 %1130
        %v1133 = vmul.f32 %v1127, %v1131
        %v1134 = vadd.f32 %v1133, %v1082
        %v1135 = vtanh.pop %v1134
        %1137 = vrot.lane.b32.xlu0 %v1135, 32
        %v1138 = vpop.permute.xlu0 %1137
        %v1140 = vmul.f32 %v1127, %v1138
        %1142 = vrot.lane.b32.xlu0 %v1140, 96
        %v1143 = vpop.permute.xlu0 %1142
        %s1145 = scalar_lea.vmem %s376, %s1077 [#allocation18]
        %1146 = vst.msk [vmem:[%s1145] sm:$0x1] %vm525, %v1143
        %s1147 = scalar_lea.vmem [#allocation3], %s1078
        %v1148 = vld [vmem:[%s1147] sm:$0x1]
        %v1149 = vsel %vm387, %v1143, 0
        %1151 = vmatpush.msra.mxu0 0.0
        %1152 = vmatpush.msra.mxu0 0.0
        %1153 = vmatpush.msra.mxu0 0.0
        %1154 = vmatpush.msra.mxu0 0.0
        %1155 = vmatpush.msra.mxu0 0.0
        %1156 = vmatpush.msra.mxu0 0.0
        %1157 = vmatpush.msra.mxu0 0.0
        %1158 = vmatpush.msra.mxu0 0.0
        %1159 = vmatpush.msra.mxu0 0.0
        %1160 = vmatpush.msra.mxu0 0.0
        %1161 = vmatpush.msra.mxu0 0.0
        %1162 = vmatpush.msra.mxu0 0.0
        %1163 = vmatpush.msra.mxu0 %v455
        %1164 = vmatpush.msra.mxu0 %v454
        %1165 = vmatpush.msra.mxu0 %v453
        %1166 = vmatpush.msra.mxu0 %v452
        %1167 = vmatmul.f32.gmra.mxu0 %v1149
        %v1168 = vpop.f32.mrf.mxu0
        %v1169 = vadd.f32 0.0, %v1168
        %1170 = vdwg.mxu0
        %v1171 = vadd.f32 %v1148, %v1169
        %v1172 = vxor.u32 %v1171, 2147483648
        %v1173 = vmul.f32 %v1172, 1.442695
        %v1174 = vpow.pop %v1173
        %v1175 = vadd.f32 %v1174, 1.0
        %v1176 = vrcp.pop %v1175
        %v1177 = vmul.f32 %v1175, %v1176
        %v1178 = vsub.f32 1.0, %v1177
        %v1179 = vmul.f32 %v1176, %v1178
        %v1180 = vadd.f32 %v1176, %v1179
        %vm1181 = vweird.f32 %v1175
        %vm1182 = vweird.f32 %v1176
        %vm1183 = vmor %vm1181, %vm1182
        %v1184 = vsel %vm1183, %v1176, %v1180
        %v1185 = vand.u32 2147483647, %v1175
        %vm1186 = vcmp.eq.f32.partialorder %v1185, 8.507059e+37
        %v1187 = vand.u32 %v1175, 2147483648
        %v1188 = vor.u32 1.1754944e-38, %v1187
        %v1189 = vsel %vm1186, %v1188, %v1184
        %v1190 = vmul.f32 1.0, %v1189
        %s1191 = scalar_lea.vmem [#allocation4], %s1078
        %v1192 = vld [vmem:[%s1191] sm:$0x1]
        %v1193 = vadd.f32 %v1192, %v1143
        %1194 = vst.msk [vmem:[%s1191] sm:$0x1] %vm525, %v1193
        %s1195 = scalar_lea.vmem [#allocation5], %s1078
        %v1196 = vld [vmem:[%s1195] sm:$0x1]
        %v1197 = vmul.f32 %v1190, %v1134
        %v1198 = vadd.f32 %v1196, %v1197
        %1199 = vst.msk [vmem:[%s1195] sm:$0x1] %vm525, %v1198
        %s1200 = sadd.s32 %s377, 6
        %s1201 = sld [smem:[#allocation7 + %s1200]]
        %s1202 = sld [smem:[#allocation8 + %s1200]]
        %s1203 = scalar_lea.vmem [#allocation4], %s1201
        %v1204 = vld [vmem:[%s1203] sm:$0x1]
        %s1205 = scalar_lea.vmem [#allocation5], %s1201
        %v1206 = vld [vmem:[%s1205] sm:$0x1]
        %s1207 = scalar_lea.vmem [#allocation2], %s1201
        %v1208 = vld [vmem:[%s1207] sm:$0x1]
        %v1210 = vsel %vm387, %v1204, 0
        %1212 = vmatpush.msra.mxu0 0.0
        %1213 = vmatpush.msra.mxu0 0.0
        %1214 = vmatpush.msra.mxu0 0.0
        %1215 = vmatpush.msra.mxu0 0.0
        %1216 = vmatpush.msra.mxu0 0.0
        %1217 = vmatpush.msra.mxu0 0.0
        %1218 = vmatpush.msra.mxu0 0.0
        %1219 = vmatpush.msra.mxu0 0.0
        %1220 = vmatpush.msra.mxu0 0.0
        %1221 = vmatpush.msra.mxu0 0.0
        %1222 = vmatpush.msra.mxu0 0.0
        %1223 = vmatpush.msra.mxu0 0.0
        %1224 = vmatpush.msra.mxu0 %v451
        %1225 = vmatpush.msra.mxu0 %v450
        %1226 = vmatpush.msra.mxu0 %v449
        %1227 = vmatpush.msra.mxu0 %v448
        %1228 = vmatmul.f32.gmra.mxu0 %v1210
        %v1229 = vpop.f32.mrf.mxu0
        %v1230 = vadd.f32 0.0, %v1229
        %1231 = vdwg.mxu0
        %v1232 = vadd.f32 %v1208, %v1230
        %v1233 = vxor.u32 %v1232, 2147483648
        %v1234 = vmul.f32 %v1233, 1.442695
        %v1235 = vpow.pop %v1234
        %v1236 = vadd.f32 %v1235, 1.0
        %v1237 = vrcp.pop %v1236
        %v1238 = vmul.f32 %v1236, %v1237
        %v1239 = vsub.f32 1.0, %v1238
        %v1240 = vmul.f32 %v1237, %v1239
        %v1241 = vadd.f32 %v1237, %v1240
        %vm1242 = vweird.f32 %v1236
        %vm1243 = vweird.f32 %v1237
        %vm1244 = vmor %vm1242, %vm1243
        %v1245 = vsel %vm1244, %v1237, %v1241
        %v1246 = vand.u32 2147483647, %v1236
        %vm1247 = vcmp.eq.f32.partialorder %v1246, 8.507059e+37
        %v1248 = vand.u32 %v1236, 2147483648
        %v1249 = vor.u32 1.1754944e-38, %v1248
        %v1250 = vsel %vm1247, %v1249, %v1245
        %v1251 = vmul.f32 1.0, %v1250
        %v1252 = vtanh.pop %v1232
        %1254 = vrot.lane.b32.xlu0 %v1252, 64
        %v1255 = vpop.permute.xlu0 %1254
        %v1257 = vmul.f32 %v1251, %v1255
        %v1258 = vadd.f32 %v1257, %v1206
        %v1259 = vtanh.pop %v1258
        %1261 = vrot.lane.b32.xlu0 %v1259, 32
        %v1262 = vpop.permute.xlu0 %1261
        %v1264 = vmul.f32 %v1251, %v1262
        %1266 = vrot.lane.b32.xlu0 %v1264, 96
        %v1267 = vpop.permute.xlu0 %1266
        %s1269 = scalar_lea.vmem %s376, %s1201 [#allocation18]
        %1270 = vst.msk [vmem:[%s1269] sm:$0x1] %vm525, %v1267
        %s1271 = scalar_lea.vmem [#allocation3], %s1202
        %v1272 = vld [vmem:[%s1271] sm:$0x1]
        %v1273 = vsel %vm387, %v1267, 0
        %1275 = vmatpush.msra.mxu0 0.0
        %1276 = vmatpush.msra.mxu0 0.0
        %1277 = vmatpush.msra.mxu0 0.0
        %1278 = vmatpush.msra.mxu0 0.0
        %1279 = vmatpush.msra.mxu0 0.0
        %1280 = vmatpush.msra.mxu0 0.0
        %1281 = vmatpush.msra.mxu0 0.0
        %1282 = vmatpush.msra.mxu0 0.0
        %1283 = vmatpush.msra.mxu0 0.0
        %1284 = vmatpush.msra.mxu0 0.0
        %1285 = vmatpush.msra.mxu0 0.0
        %1286 = vmatpush.msra.mxu0 0.0
        %1287 = vmatpush.msra.mxu0 %v455
        %1288 = vmatpush.msra.mxu0 %v454
        %1289 = vmatpush.msra.mxu0 %v453
        %1290 = vmatpush.msra.mxu0 %v452
        %1291 = vmatmul.f32.gmra.mxu0 %v1273
        %v1292 = vpop.f32.mrf.mxu0
        %v1293 = vadd.f32 0.0, %v1292
        %1294 = vdwg.mxu0
        %v1295 = vadd.f32 %v1272, %v1293
        %v1296 = vxor.u32 %v1295, 2147483648
        %v1297 = vmul.f32 %v1296, 1.442695
        %v1298 = vpow.pop %v1297
        %v1299 = vadd.f32 %v1298, 1.0
        %v1300 = vrcp.pop %v1299
        %v1301 = vmul.f32 %v1299, %v1300
        %v1302 = vsub.f32 1.0, %v1301
        %v1303 = vmul.f32 %v1300, %v1302
        %v1304 = vadd.f32 %v1300, %v1303
        %vm1305 = vweird.f32 %v1299
        %vm1306 = vweird.f32 %v1300
        %vm1307 = vmor %vm1305, %vm1306
        %v1308 = vsel %vm1307, %v1300, %v1304
        %v1309 = vand.u32 2147483647, %v1299
        %vm1310 = vcmp.eq.f32.partialorder %v1309, 8.507059e+37
        %v1311 = vand.u32 %v1299, 2147483648
        %v1312 = vor.u32 1.1754944e-38, %v1311
        %v1313 = vsel %vm1310, %v1312, %v1308
        %v1314 = vmul.f32 1.0, %v1313
        %s1315 = scalar_lea.vmem [#allocation4], %s1202
        %v1316 = vld [vmem:[%s1315] sm:$0x1]
        %v1317 = vadd.f32 %v1316, %v1267
        %1318 = vst.msk [vmem:[%s1315] sm:$0x1] %vm525, %v1317
        %s1319 = scalar_lea.vmem [#allocation5], %s1202
        %v1320 = vld [vmem:[%s1319] sm:$0x1]
        %v1321 = vmul.f32 %v1314, %v1258
        %v1322 = vadd.f32 %v1320, %v1321
        %1323 = vst.msk [vmem:[%s1319] sm:$0x1] %vm525, %v1322
        %s1324 = sadd.s32 %s377, 7
        %s1325 = sld [smem:[#allocation7 + %s1324]]
        %s1326 = sld [smem:[#allocation8 + %s1324]]
        %s1327 = scalar_lea.vmem [#allocation4], %s1325
        %v1328 = vld [vmem:[%s1327] sm:$0x1]
        %s1329 = scalar_lea.vmem [#allocation5], %s1325
        %v1330 = vld [vmem:[%s1329] sm:$0x1]
        %s1331 = scalar_lea.vmem [#allocation2], %s1325
        %v1332 = vld [vmem:[%s1331] sm:$0x1]
        %v1334 = vsel %vm387, %v1328, 0
        %1336 = vmatpush.msra.mxu0 0.0
        %1337 = vmatpush.msra.mxu0 0.0
        %1338 = vmatpush.msra.mxu0 0.0
        %1339 = vmatpush.msra.mxu0 0.0
        %1340 = vmatpush.msra.mxu0 0.0
        %1341 = vmatpush.msra.mxu0 0.0
        %1342 = vmatpush.msra.mxu0 0.0
        %1343 = vmatpush.msra.mxu0 0.0
        %1344 = vmatpush.msra.mxu0 0.0
        %1345 = vmatpush.msra.mxu0 0.0
        %1346 = vmatpush.msra.mxu0 0.0
        %1347 = vmatpush.msra.mxu0 0.0
        %1348 = vmatpush.msra.mxu0 %v451
        %1349 = vmatpush.msra.mxu0 %v450
        %1350 = vmatpush.msra.mxu0 %v449
        %1351 = vmatpush.msra.mxu0 %v448
        %1352 = vmatmul.f32.gmra.mxu0 %v1334
        %v1353 = vpop.f32.mrf.mxu0
        %v1354 = vadd.f32 0.0, %v1353
        %1355 = vdwg.mxu0
        %v1356 = vadd.f32 %v1332, %v1354
        %v1357 = vxor.u32 %v1356, 2147483648
        %v1358 = vmul.f32 %v1357, 1.442695
        %v1359 = vpow.pop %v1358
        %v1360 = vadd.f32 %v1359, 1.0
        %v1361 = vrcp.pop %v1360
        %v1362 = vmul.f32 %v1360, %v1361
        %v1363 = vsub.f32 1.0, %v1362
        %v1364 = vmul.f32 %v1361, %v1363
        %v1365 = vadd.f32 %v1361, %v1364
        %vm1366 = vweird.f32 %v1360
        %vm1367 = vweird.f32 %v1361
        %vm1368 = vmor %vm1366, %vm1367
        %v1369 = vsel %vm1368, %v1361, %v1365
        %v1370 = vand.u32 2147483647, %v1360
        %vm1371 = vcmp.eq.f32.partialorder %v1370, 8.507059e+37
        %v1372 = vand.u32 %v1360, 2147483648
        %v1373 = vor.u32 1.1754944e-38, %v1372
        %v1374 = vsel %vm1371, %v1373, %v1369
        %v1375 = vmul.f32 1.0, %v1374
        %v1376 = vtanh.pop %v1356
        %1378 = vrot.lane.b32.xlu0 %v1376, 64
        %v1379 = vpop.permute.xlu0 %1378
        %v1381 = vmul.f32 %v1375, %v1379
        %v1382 = vadd.f32 %v1381, %v1330
        %v1383 = vtanh.pop %v1382
        %1385 = vrot.lane.b32.xlu0 %v1383, 32
        %v1386 = vpop.permute.xlu0 %1385
        %v1388 = vmul.f32 %v1375, %v1386
        %1390 = vrot.lane.b32.xlu0 %v1388, 96
        %v1391 = vpop.permute.xlu0 %1390
        %s1393 = scalar_lea.vmem %s376, %s1325 [#allocation18]
        %1394 = vst.msk [vmem:[%s1393] sm:$0x1] %vm525, %v1391
        %s1395 = scalar_lea.vmem [#allocation3], %s1326
        %v1396 = vld [vmem:[%s1395] sm:$0x1]
        %v1397 = vsel %vm387, %v1391, 0
        %1399 = vmatpush.msra.mxu0 0.0
        %1400 = vmatpush.msra.mxu0 0.0
        %1401 = vmatpush.msra.mxu0 0.0
        %1402 = vmatpush.msra.mxu0 0.0
        %1403 = vmatpush.msra.mxu0 0.0
        %1404 = vmatpush.msra.mxu0 0.0
        %1405 = vmatpush.msra.mxu0 0.0
        %1406 = vmatpush.msra.mxu0 0.0
        %1407 = vmatpush.msra.mxu0 0.0
        %1408 = vmatpush.msra.mxu0 0.0
        %1409 = vmatpush.msra.mxu0 0.0
        %1410 = vmatpush.msra.mxu0 0.0
        %1411 = vmatpush.msra.mxu0 %v455
        %1412 = vmatpush.msra.mxu0 %v454
        %1413 = vmatpush.msra.mxu0 %v453
        %1414 = vmatpush.msra.mxu0 %v452
        %1415 = vmatmul.f32.gmra.mxu0 %v1397
        %v1416 = vpop.f32.mrf.mxu0
        %v1417 = vadd.f32 0.0, %v1416
        %1418 = vdwg.mxu0
        %v1419 = vadd.f32 %v1396, %v1417
        %v1420 = vxor.u32 %v1419, 2147483648
        %v1421 = vmul.f32 %v1420, 1.442695
        %v1422 = vpow.pop %v1421
        %v1423 = vadd.f32 %v1422, 1.0
        %v1424 = vrcp.pop %v1423
        %v1425 = vmul.f32 %v1423, %v1424
        %v1426 = vsub.f32 1.0, %v1425
        %v1427 = vmul.f32 %v1424, %v1426
        %v1428 = vadd.f32 %v1424, %v1427
        %vm1429 = vweird.f32 %v1423
        %vm1430 = vweird.f32 %v1424
        %vm1431 = vmor %vm1429, %vm1430
        %v1432 = vsel %vm1431, %v1424, %v1428
        %v1433 = vand.u32 2147483647, %v1423
        %vm1434 = vcmp.eq.f32.partialorder %v1433, 8.507059e+37
        %v1435 = vand.u32 %v1423, 2147483648
        %v1436 = vor.u32 1.1754944e-38, %v1435
        %v1437 = vsel %vm1434, %v1436, %v1432
        %v1438 = vmul.f32 1.0, %v1437
        %s1439 = scalar_lea.vmem [#allocation4], %s1326
        %v1440 = vld [vmem:[%s1439] sm:$0x1]
        %v1441 = vadd.f32 %v1440, %v1391
        %1442 = vst.msk [vmem:[%s1439] sm:$0x1] %vm525, %v1441
        %s1443 = scalar_lea.vmem [#allocation5], %s1326
        %v1444 = vld [vmem:[%s1443] sm:$0x1]
        %v1445 = vmul.f32 %v1438, %v1382
        %v1446 = vadd.f32 %v1444, %v1445
        %1447 = vst.msk [vmem:[%s1443] sm:$0x1] %vm525, %v1446
        %s1448 = sand.u32 %s201, 1
        %s1449 = scalar_lea.sflag [#allocation11], %s1448
        %s1450 = sand.u32 %s201, 1
        %s1451 = smul.addr %s1450, 8
        %s1452 = scalar_lea.vmem [#allocation18], %s1451
        // Predicated region
        $region69: #{tpu_custom_call.1} parent=47 // pred_check
          %p1453 = pneg %p211
        $region70: #{tpu_custom_call.1} parent=47 // pred_check_branch
          %1455 = sbr.rel (%p1453) target = $region72
        $region71: #{tpu_custom_call.1} parent=47 // pred_region
          %1457 = vsyncadd %s1449, 0
          %s1458 = smul.addr %s41, 8
          %s1459 = scalar_lea.hbm %s9, %s1458
          %s1461 = sshll.u32 %s1452, 4
          %s1462 = int_to_ptr.vmem [resolvable:$true] %s1461
          %s1463 = sshll.u32 %s1459, 4
          %s1464 = int_to_ptr.hbm [resolvable:$true] %s1463
          %1466 = dma.vmem_to_hbm [thread:$0]  %s1462, 128, %s1464, %s1449
        $region72: #{tpu_custom_call.1} parent=47 // pred_fallthru
          _
      $region48: #{tpu_custom_call.1} parent=5 // pred_fallthru
        _
      %p1467 = scmp.le.s32.totalorder 2, %s36
      // Predicated region
      $region73: #{tpu_custom_call.1} parent=5 // pred_check
        %p1468 = pneg %p1467
      $region74: #{tpu_custom_call.1} parent=5 // pred_check_branch
        %1470 = sbr.rel (%p1468) target = $region76
      $region75: #{tpu_custom_call.1} parent=5 // pred_region
        %s1471 = ssub.s32 %s36, 2
        // Predicated region
        $region77: #{tpu_custom_call.1} parent=75 // pred_check
          %p1472 = pneg %p217
        $region78: #{tpu_custom_call.1} parent=75 // pred_check_branch
          %1474 = sbr.rel (%p1472) target = $region80
        $region79: #{tpu_custom_call.1} parent=75 // pred_region
          %s1475 = sand.u32 %s202, 1
          %s1476 = scalar_lea.sflag [#allocation11], %s1475
          %s1477 = sand.u32 %s202, 1
          %s1478 = smul.addr %s1477, 8
          %s1479 = scalar_lea.vmem [#allocation18], %s1478
          %1481 = dma.done %s1476, 128
        $region80: #{tpu_custom_call.1} parent=75 // pred_fallthru
          _
      $region76: #{tpu_custom_call.1} parent=5 // pred_fallthru
        _
    $region6: #{tpu_custom_call.1} parent=1 // loop_footer
      %s40 = sadd.s32 1, %s36
    $region7: #{tpu_custom_call.1} parent=1 // loop_footer_branch
      %35 = sbr.rel target = $region3
    $region8: #{tpu_custom_call.1} parent=1 // loop_exit
      _
    %1482 = vsyncpa [#allocation10], 1
    %s1483 = scalar_lea.sflag [#allocation10], 1
    %1484 = vsyncpa %s1483, 1
    %1485 = vsyncpa [#allocation13], 1
    %1486 = vsyncpa [#allocation16], 1
    %1487 = vsyncpa [#allocation11], 1
    %s1488 = scalar_lea.sflag [#allocation11], 1
    %1489 = vsyncpa %s1488, 1

</llo_original>
